<compile_context>
chip_gen: v6e
topology: v6e:2x2x1
jax: 0.10.0
libtpu: 0.0.40
codegen_flags: <defaults>
</compile_context>

<pallas_src>
import math
import jax
import jax.numpy as jnp
from jax import lax
from jax.experimental import pallas as pl
from jax.experimental.pallas import tpu as pltpu

# ---- small, forward-consistent config (cfg) ----
VOCAB    = 128
EMB      = 64
N_HEADS  = 4
HEAD_DIM = EMB // N_HEADS          # 16
N_LAYERS = 2
HIDDEN   = 128                     # SwiGLU hidden dim
CTX      = 8
BATCH    = 2
SEQ      = 8
DTYPE    = jnp.float32             # activation / logits dtype
WDTYPE   = jnp.bfloat16            # MXU operand dtype (accumulation stays f32)
EPS      = 1e-5
ROPE_THETA = 10000.0


# ---------------- single fused forward kernel (whole batch in one grid step) ----------------
def _fused_forward_kernel(idx_ref, tok_emb_ref, norm1_ref, wqkv_ref, wo_ref,
                          norm2_ref, wff_ref, fc3_ref, fnorm_ref, whead_ref,
                          cos_ref, sin_ref, bias_ref, o_ref):
    BS = idx_ref.shape[0]                                           # B*S (static)

    # --- fused token-embedding gather: one-hot(indices) @ tok_emb on the MXU ---
    idx = idx_ref[...]                                              # (BS, 1) int32
    col = lax.broadcasted_iota(jnp.int32, (BS, VOCAB), 1)
    onehot = (col == idx).astype(WDTYPE)                            # exact 0/1 in bf16
    x = jnp.dot(onehot, tok_emb_ref[...],
                preferred_element_type=jnp.float32)                 # (BS, EMB) f32

    cos  = cos_ref[...]                                             # (BS, EMB) f32
    sin  = sin_ref[...]                                             # (BS, EMB) f32
    bias = bias_ref[...]                                            # (BS, BS)  f32 causal + batch-block mask

    def rms(v, w):                                                  # RMSNorm in f32
        ms = jnp.mean(v * v, axis=-1, keepdims=True)
        return v * lax.rsqrt(ms + EPS) * w

    for l in range(N_LAYERS):                                       # statically unrolled
        w_n1  = norm1_ref[l]                                        # (1, EMB)      f32
        w_qkv = wqkv_ref[l]                                         # (EMB, 5*EMB)  bf16: [Wq*s, Wq*s@R, Wk, Wk@R, Wv]
        w_o   = wo_ref[l]                                           # (EMB, EMB)    bf16
        w_n2  = norm2_ref[l]                                        # (1, EMB)      f32
        w_ff  = wff_ref[l]                                          # (EMB, 2*HID)  bf16
        w_fc3 = fc3_ref[l]                                          # (HID, EMB)    bf16

        # --- attention sub-block ---
        xn  = rms(x, w_n1).astype(WDTYPE)
        qkv = jnp.dot(xn, w_qkv, preferred_element_type=jnp.float32)       # (BS, 5*EMB)
        # whole-slab RoPE: rotate-half (and its sign) pre-folded into Wq@R / Wk@R columns
        q = qkv[:, 0 * EMB:1 * EMB] * cos + qkv[:, 1 * EMB:2 * EMB] * sin  # (BS, EMB)
        k = qkv[:, 2 * EMB:3 * EMB] * cos + qkv[:, 3 * EMB:4 * EMB] * sin  # (BS, EMB)
        qb = q.astype(WDTYPE)
        kb = k.astype(WDTYPE)
        vb = qkv[:, 4 * EMB:5 * EMB].astype(WDTYPE)

        heads = []
        for h in range(N_HEADS):                                    # statically unrolled (4 heads)
            off = h * HEAD_DIM
            s = jnp.dot(qb[:, off:off + HEAD_DIM], kb[:, off:off + HEAD_DIM].T,
                        preferred_element_type=jnp.float32)         # (BS, BS), both batches at once
            s = s + bias                                            # block-diag causal mask
            m = jnp.max(s, axis=-1, keepdims=True)
            p = jnp.exp(s - m)
            p = p * pl.reciprocal(jnp.sum(p, axis=-1, keepdims=True), approx=True)
            heads.append(jnp.dot(p.astype(WDTYPE), vb[:, off:off + HEAD_DIM],
                                 preferred_element_type=jnp.float32))
        ctx = jnp.concatenate(heads, axis=-1).astype(WDTYPE)        # (BS, EMB), lane-dense
        x = x + jnp.dot(ctx, w_o, preferred_element_type=jnp.float32)

        # --- feed-forward (SwiGLU) sub-block ---
        xn2 = rms(x, w_n2).astype(WDTYPE)
        ab  = jnp.dot(xn2, w_ff, preferred_element_type=jnp.float32)       # (BS, 2*HIDDEN)
        a = ab[:, :HIDDEN]
        b = ab[:, HIDDEN:]
        hid = (a * pl.reciprocal(1.0 + jnp.exp(-a), approx=True) * b).astype(WDTYPE)
        x = x + jnp.dot(hid, w_fc3, preferred_element_type=jnp.float32)

    # --- final norm + LM head (lane-dense 128-wide output) ---
    xn = rms(x, fnorm_ref[...]).astype(WDTYPE)
    logits = jnp.dot(xn, whead_ref[...], preferred_element_type=jnp.float32)
    o_ref[...] = logits.astype(o_ref.dtype)


def forward(params, in_idx):
    B, S = in_idx.shape
    BS = B * S
    idx = in_idx.reshape(BS, 1).astype(jnp.int32)

    inputs = (idx, params["tok_emb"], params["norm1"], params["wqkv"], params["wo"],
              params["norm2"], params["wff"], params["fc3"], params["final_norm"],
              params["out_head"], params["cos_bs"], params["sin_bs"], params["bias_bs"])

    def full_spec(shape):  # whole-array block, same block every (single) grid step
        n = len(shape)
        return pl.BlockSpec(shape, lambda i, _n=n: (0,) * _n)

    logits = pl.pallas_call(
        _fused_forward_kernel,
        out_shape=jax.ShapeDtypeStruct((BS, VOCAB), DTYPE),
        grid=(1,),
        in_specs=[full_spec(a.shape) for a in inputs],
        out_specs=full_spec((BS, VOCAB)),
        compiler_params=pltpu.CompilerParams(dimension_semantics=("arbitrary",)),
    )(*inputs)
    return logits.reshape(B, S, VOCAB)


# -------- parameter init (deterministic, synthetic; QKV/RoPE-rotation/scale and fc1/fc2 pre-fused) --------
def init_params(key):
    def nrm(k, shape):
        return 0.02 * jax.random.normal(k, shape, dtype=jnp.float32)

    # rotate-half rotation (signs folded in), block-diagonal over heads: rot(t) = t @ R
    half = HEAD_DIM // 2
    r_head = jnp.zeros((HEAD_DIM, HEAD_DIM), jnp.float32)
    r_head = r_head.at[jnp.arange(half), jnp.arange(half) + half].set(1.0)   # +t1 -> second half
    r_head = r_head.at[jnp.arange(half) + half, jnp.arange(half)].set(-1.0)  # -t2 -> first half
    R = jnp.kron(jnp.eye(N_HEADS, dtype=jnp.float32), r_head)                # (EMB, EMB)

    keys = jax.random.split(key, 3 + N_LAYERS)
    tok_emb  = nrm(keys[0], (VOCAB, EMB)).astype(WDTYPE)
    out_head = nrm(keys[1], (EMB, VOCAB)).astype(WDTYPE)

    scale = 1.0 / math.sqrt(HEAD_DIM)
    norm1, wqkv, wo, norm2, wff, fc3 = [], [], [], [], [], []
    for i in range(N_LAYERS):
        lk = jax.random.split(keys[3 + i], 7)
        wq = nrm(lk[0], (EMB, EMB)) * scale                         # 1/sqrt(Dh) folded into Wq
        wk = nrm(lk[1], (EMB, EMB))
        wv = nrm(lk[2], (EMB, EMB))
        norm1.append(jnp.ones((1, EMB), jnp.float32))
        wqkv.append(jnp.concatenate([wq, wq @ R, wk, wk @ R, wv], axis=1).astype(WDTYPE))  # (EMB, 5*EMB)
        wo.append(nrm(lk[3], (EMB, EMB)).astype(WDTYPE))
        norm2.append(jnp.ones((1, EMB), jnp.float32))
        wff.append(jnp.concatenate([nrm(lk[4], (EMB, HIDDEN)),
                                    nrm(lk[5], (EMB, HIDDEN))], axis=1).astype(WDTYPE))    # (EMB, 2*HIDDEN)
        fc3.append(nrm(lk[6], (HIDDEN, EMB)).astype(WDTYPE))

    params = {
        "tok_emb": tok_emb,
        "out_head": out_head,
        "final_norm": jnp.ones((1, EMB), jnp.float32),
        "norm1": jnp.stack(norm1),
        "wqkv":  jnp.stack(wqkv),
        "wo":    jnp.stack(wo),
        "norm2": jnp.stack(norm2),
        "wff":   jnp.stack(wff),
        "fc3":   jnp.stack(fc3),
    }

    # RoPE tables (rotate-half convention), tiled per head and per batch to the merged (B*S, EMB) slab
    inv_freq = 1.0 / (ROPE_THETA ** (jnp.arange(0, HEAD_DIM, 2, dtype=jnp.float32) / HEAD_DIM))
    pos = jnp.arange(SEQ, dtype=jnp.float32)
    angles = pos[:, None] * inv_freq[None, :]                       # (SEQ, HEAD_DIM/2)
    angles = jnp.concatenate([angles, angles], axis=-1)             # (SEQ, HEAD_DIM)
    cos_emb = jnp.tile(jnp.cos(angles), (1, N_HEADS))               # (SEQ, EMB)
    sin_emb = jnp.tile(jnp.sin(angles), (1, N_HEADS))
    params["cos_bs"] = jnp.tile(cos_emb, (BATCH, 1)).astype(jnp.float32)   # (BATCH*SEQ, EMB)
    params["sin_bs"] = jnp.tile(sin_emb, (BATCH, 1)).astype(jnp.float32)

    # additive block-diagonal causal bias for the merged-batch slab
    r = jnp.arange(BATCH * SEQ)
    same_batch = (r[:, None] // SEQ) == (r[None, :] // SEQ)
    causal = (r[None, :] % SEQ) <= (r[:, None] % SEQ)
    params["bias_bs"] = jnp.where(same_batch & causal, 0.0, -1e30).astype(jnp.float32)  # (B*S, B*S)
    return params


if __name__ == "__main__":
    key = jax.random.PRNGKey(0)
    params = init_params(key)
    in_idx = jax.random.randint(jax.random.fold_in(key, 999), (BATCH, SEQ), 0, VOCAB,
                                dtype=jnp.int32)

    fwd = jax.jit(forward)
    logits = jax.block_until_ready(fwd(params, in_idx))

    assert logits.shape == (BATCH, SEQ, VOCAB), logits.shape
    assert logits.dtype == DTYPE
    assert bool(jnp.all(jnp.isfinite(logits)))
    print("KERNEL_OK")
</pallas_src>

<mosaic_0001>
module attributes {stable_mosaic.version = 11 : i64} {
  func.func @_fused_forward_kernel(%arg0: i32, %arg1: memref<16x1xi32, #tpu.memory_space<vmem>>, %arg2: memref<128x64xbf16, #tpu.memory_space<vmem>>, %arg3: memref<2x1x64xf32, #tpu.memory_space<vmem>>, %arg4: memref<2x64x320xbf16, #tpu.memory_space<vmem>>, %arg5: memref<2x64x64xbf16, #tpu.memory_space<vmem>>, %arg6: memref<2x1x64xf32, #tpu.memory_space<vmem>>, %arg7: memref<2x64x256xbf16, #tpu.memory_space<vmem>>, %arg8: memref<2x128x64xbf16, #tpu.memory_space<vmem>>, %arg9: memref<1x64xf32, #tpu.memory_space<vmem>>, %arg10: memref<64x128xbf16, #tpu.memory_space<vmem>>, %arg11: memref<16x64xf32, #tpu.memory_space<vmem>>, %arg12: memref<16x64xf32, #tpu.memory_space<vmem>>, %arg13: memref<16x16xf32, #tpu.memory_space<vmem>>, %arg14: memref<16x128xf32, #tpu.memory_space<vmem>>) attributes {dimension_semantics = [#tpu.dimension_semantics<arbitrary>], iteration_bounds = array<i64: 1>, scalar_prefetch = 0 : i64, scratch_operands = 0 : i64, tpu.core_type = #tpu.core_type<tc>, window_params = [{pipeline_mode = #tpu.pipeline_mode<synchronous>, transform_indices = @transform_0, window_bounds = array<i64: 16, 1>}, {pipeline_mode = #tpu.pipeline_mode<synchronous>, transform_indices = @transform_1, window_bounds = array<i64: 128, 64>}, {pipeline_mode = #tpu.pipeline_mode<synchronous>, transform_indices = @transform_2, window_bounds = array<i64: 2, 1, 64>}, {pipeline_mode = #tpu.pipeline_mode<synchronous>, transform_indices = @transform_3, window_bounds = array<i64: 2, 64, 320>}, {pipeline_mode = #tpu.pipeline_mode<synchronous>, transform_indices = @transform_4, window_bounds = array<i64: 2, 64, 64>}, {pipeline_mode = #tpu.pipeline_mode<synchronous>, transform_indices = @transform_5, window_bounds = array<i64: 2, 1, 64>}, {pipeline_mode = #tpu.pipeline_mode<synchronous>, transform_indices = @transform_6, window_bounds = array<i64: 2, 64, 256>}, {pipeline_mode = #tpu.pipeline_mode<synchronous>, transform_indices = @transform_7, window_bounds = array<i64: 2, 128, 64>}, {pipeline_mode = #tpu.pipeline_mode<synchronous>, transform_indices = @transform_8, window_bounds = array<i64: 1, 64>}, {pipeline_mode = #tpu.pipeline_mode<synchronous>, transform_indices = @transform_9, window_bounds = array<i64: 64, 128>}, {pipeline_mode = #tpu.pipeline_mode<synchronous>, transform_indices = @transform_10, window_bounds = array<i64: 16, 64>}, {pipeline_mode = #tpu.pipeline_mode<synchronous>, transform_indices = @transform_11, window_bounds = array<i64: 16, 64>}, {pipeline_mode = #tpu.pipeline_mode<synchronous>, transform_indices = @transform_12, window_bounds = array<i64: 16, 16>}, {pipeline_mode = #tpu.pipeline_mode<synchronous>, transform_indices = @transform_13, window_bounds = array<i64: 16, 128>}]} {
    %c0 = arith.constant 0 : index
    %c0_0 = arith.constant 0 : index
    %0 = vector.load %arg1[%c0, %c0_0] : memref<16x1xi32, #tpu.memory_space<vmem>>, vector<16x1xi32>
    %1 = tpu.iota {dimensions = array<i32: 1>} : vector<16x128xi32>
    %2 = vector.broadcast %0 : vector<16x1xi32> to vector<16x128xi32>
    %3 = arith.cmpi eq, %1, %2 : vector<16x128xi32>
    %4 = arith.extui %3 : vector<16x128xi1> to vector<16x128xi32>
    %5 = arith.sitofp %4 : vector<16x128xi32> to vector<16x128xf32>
    %6 = arith.truncf %5 : vector<16x128xf32> to vector<16x128xbf16>
    %c0_1 = arith.constant 0 : index
    %c0_2 = arith.constant 0 : index
    %7 = vector.load %arg2[%c0_1, %c0_2] : memref<128x64xbf16, #tpu.memory_space<vmem>>, vector<128x64xbf16>
    %cst = arith.constant dense<0.000000e+00> : vector<16x64xf32>
    %8 = tpu.matmul %6, %7, %cst {dimension_numbers = #tpu.dot_dimension_numbers<[1], [0], [0], [1], [0, 0, 1, 1], [], []>} : vector<16x128xbf16>, vector<128x64xbf16>, vector<16x64xf32> -> vector<16x64xf32>
    %c0_3 = arith.constant 0 : index
    %c0_4 = arith.constant 0 : index
    %9 = vector.load %arg11[%c0_3, %c0_4] : memref<16x64xf32, #tpu.memory_space<vmem>>, vector<16x64xf32>
    %c0_5 = arith.constant 0 : index
    %c0_6 = arith.constant 0 : index
    %10 = vector.load %arg12[%c0_5, %c0_6] : memref<16x64xf32, #tpu.memory_space<vmem>>, vector<16x64xf32>
    %c0_7 = arith.constant 0 : index
    %c0_8 = arith.constant 0 : index
    %11 = vector.load %arg13[%c0_7, %c0_8] : memref<16x16xf32, #tpu.memory_space<vmem>>, vector<16x16xf32>
    %c0_9 = arith.constant 0 : index
    %c0_10 = arith.constant 0 : index
    %c0_11 = arith.constant 0 : index
    %12 = vector.load %arg3[%c0_9, %c0_10, %c0_11] : memref<2x1x64xf32, #tpu.memory_space<vmem>>, vector<1x1x64xf32>
    %13 = vector.shape_cast %12 : vector<1x1x64xf32> to vector<1x64xf32>
    %c0_12 = arith.constant 0 : index
    %c0_13 = arith.constant 0 : index
    %c0_14 = arith.constant 0 : index
    %14 = vector.load %arg4[%c0_12, %c0_13, %c0_14] : memref<2x64x320xbf16, #tpu.memory_space<vmem>>, vector<1x64x320xbf16>
    %15 = vector.shape_cast %14 : vector<1x64x320xbf16> to vector<64x320xbf16>
    %c0_15 = arith.constant 0 : index
    %c0_16 = arith.constant 0 : index
    %c0_17 = arith.constant 0 : index
    %16 = vector.load %arg5[%c0_15, %c0_16, %c0_17] : memref<2x64x64xbf16, #tpu.memory_space<vmem>>, vector<1x64x64xbf16>
    %17 = vector.shape_cast %16 : vector<1x64x64xbf16> to vector<64x64xbf16>
    %c0_18 = arith.constant 0 : index
    %c0_19 = arith.constant 0 : index
    %c0_20 = arith.constant 0 : index
    %18 = vector.load %arg6[%c0_18, %c0_19, %c0_20] : memref<2x1x64xf32, #tpu.memory_space<vmem>>, vector<1x1x64xf32>
    %19 = vector.shape_cast %18 : vector<1x1x64xf32> to vector<1x64xf32>
    %c0_21 = arith.constant 0 : index
    %c0_22 = arith.constant 0 : index
    %c0_23 = arith.constant 0 : index
    %20 = vector.load %arg7[%c0_21, %c0_22, %c0_23] : memref<2x64x256xbf16, #tpu.memory_space<vmem>>, vector<1x64x256xbf16>
    %21 = vector.shape_cast %20 : vector<1x64x256xbf16> to vector<64x256xbf16>
    %c0_24 = arith.constant 0 : index
    %c0_25 = arith.constant 0 : index
    %c0_26 = arith.constant 0 : index
    %22 = vector.load %arg8[%c0_24, %c0_25, %c0_26] : memref<2x128x64xbf16, #tpu.memory_space<vmem>>, vector<1x128x64xbf16>
    %23 = vector.shape_cast %22 : vector<1x128x64xbf16> to vector<128x64xbf16>
    %24 = arith.mulf %8, %8 : vector<16x64xf32>
    %cst_27 = arith.constant dense<0.000000e+00> : vector<16xf32>
    %25 = vector.multi_reduction <add>, %24, %cst_27 [1] : vector<16x64xf32> to vector<16xf32>
    %26 = vector.shape_cast %25 : vector<16xf32> to vector<16x1xf32>
    %cst_28 = arith.constant 6.400000e+01 : f32
    %27 = vector.broadcast %cst_28 : f32 to vector<16x1xf32>
    %28 = arith.divf %26, %27 : vector<16x1xf32>
    %cst_29 = arith.constant 9.99999974E-6 : f32
    %29 = vector.broadcast %cst_29 : f32 to vector<16x1xf32>
    %30 = arith.addf %28, %29 : vector<16x1xf32>
    %31 = math.rsqrt %30 : vector<16x1xf32>
    %32 = vector.broadcast %31 : vector<16x1xf32> to vector<16x64xf32>
    %33 = arith.mulf %8, %32 : vector<16x64xf32>
    %34 = vector.broadcast %13 : vector<1x64xf32> to vector<16x64xf32>
    %35 = arith.mulf %33, %34 : vector<16x64xf32>
    %36 = arith.truncf %35 : vector<16x64xf32> to vector<16x64xbf16>
    %cst_30 = arith.constant dense<0.000000e+00> : vector<16x320xf32>
    %37 = tpu.matmul %36, %15, %cst_30 {dimension_numbers = #tpu.dot_dimension_numbers<[1], [0], [0], [1], [0, 0, 1, 1], [], []>} : vector<16x64xbf16>, vector<64x320xbf16>, vector<16x320xf32> -> vector<16x320xf32>
    %38 = vector.extract_strided_slice %37 {offsets = [0, 0], sizes = [16, 64], strides = [1, 1]} : vector<16x320xf32> to vector<16x64xf32>
    %39 = arith.mulf %38, %9 : vector<16x64xf32>
    %40 = vector.extract_strided_slice %37 {offsets = [0, 64], sizes = [16, 64], strides = [1, 1]} : vector<16x320xf32> to vector<16x64xf32>
    %41 = arith.mulf %40, %10 : vector<16x64xf32>
    %42 = arith.addf %39, %41 : vector<16x64xf32>
    %43 = vector.extract_strided_slice %37 {offsets = [0, 128], sizes = [16, 64], strides = [1, 1]} : vector<16x320xf32> to vector<16x64xf32>
    %44 = arith.mulf %43, %9 : vector<16x64xf32>
    %45 = vector.extract_strided_slice %37 {offsets = [0, 192], sizes = [16, 64], strides = [1, 1]} : vector<16x320xf32> to vector<16x64xf32>
    %46 = arith.mulf %45, %10 : vector<16x64xf32>
    %47 = arith.addf %44, %46 : vector<16x64xf32>
    %48 = arith.truncf %42 : vector<16x64xf32> to vector<16x64xbf16>
    %49 = arith.truncf %47 : vector<16x64xf32> to vector<16x64xbf16>
    %50 = vector.extract_strided_slice %37 {offsets = [0, 256], sizes = [16, 64], strides = [1, 1]} : vector<16x320xf32> to vector<16x64xf32>
    %51 = arith.truncf %50 : vector<16x64xf32> to vector<16x64xbf16>
    %52 = vector.extract_strided_slice %48 {offsets = [0, 0], sizes = [16, 16], strides = [1, 1]} : vector<16x64xbf16> to vector<16x16xbf16>
    %53 = vector.extract_strided_slice %49 {offsets = [0, 0], sizes = [16, 16], strides = [1, 1]} : vector<16x64xbf16> to vector<16x16xbf16>
    %54 = tpu.transpose %53, [1, 0] : vector<16x16xbf16> -> vector<16x16xbf16>
    %cst_31 = arith.constant dense<0.000000e+00> : vector<16x16xf32>
    %55 = tpu.matmul %52, %54, %cst_31 {dimension_numbers = #tpu.dot_dimension_numbers<[1], [0], [0], [1], [0, 0, 1, 1], [], []>} : vector<16x16xbf16>, vector<16x16xbf16>, vector<16x16xf32> -> vector<16x16xf32>
    %56 = arith.addf %55, %11 : vector<16x16xf32>
    %cst_32 = arith.constant dense<0xFF800000> : vector<16xf32>
    %57 = vector.multi_reduction <maximumf>, %56, %cst_32 [1] : vector<16x16xf32> to vector<16xf32>
    %58 = vector.shape_cast %57 : vector<16xf32> to vector<16x1xf32>
    %59 = vector.broadcast %58 : vector<16x1xf32> to vector<16x16xf32>
    %60 = arith.subf %56, %59 : vector<16x16xf32>
    %61 = math.exp %60 : vector<16x16xf32>
    %cst_33 = arith.constant dense<0.000000e+00> : vector<16xf32>
    %62 = vector.multi_reduction <add>, %61, %cst_33 [1] : vector<16x16xf32> to vector<16xf32>
    %63 = vector.shape_cast %62 : vector<16xf32> to vector<16x1xf32>
    %64 = tpu.reciprocal %63 {approx = true} : vector<16x1xf32> -> vector<16x1xf32>
    %65 = vector.broadcast %64 : vector<16x1xf32> to vector<16x16xf32>
    %66 = arith.mulf %61, %65 : vector<16x16xf32>
    %67 = arith.truncf %66 : vector<16x16xf32> to vector<16x16xbf16>
    %68 = vector.extract_strided_slice %51 {offsets = [0, 0], sizes = [16, 16], strides = [1, 1]} : vector<16x64xbf16> to vector<16x16xbf16>
    %cst_34 = arith.constant dense<0.000000e+00> : vector<16x16xf32>
    %69 = tpu.matmul %67, %68, %cst_34 {dimension_numbers = #tpu.dot_dimension_numbers<[1], [0], [0], [1], [0, 0, 1, 1], [], []>} : vector<16x16xbf16>, vector<16x16xbf16>, vector<16x16xf32> -> vector<16x16xf32>
    %70 = vector.extract_strided_slice %48 {offsets = [0, 16], sizes = [16, 16], strides = [1, 1]} : vector<16x64xbf16> to vector<16x16xbf16>
    %71 = vector.extract_strided_slice %49 {offsets = [0, 16], sizes = [16, 16], strides = [1, 1]} : vector<16x64xbf16> to vector<16x16xbf16>
    %72 = tpu.transpose %71, [1, 0] : vector<16x16xbf16> -> vector<16x16xbf16>
    %cst_35 = arith.constant dense<0.000000e+00> : vector<16x16xf32>
    %73 = tpu.matmul %70, %72, %cst_35 {dimension_numbers = #tpu.dot_dimension_numbers<[1], [0], [0], [1], [0, 0, 1, 1], [], []>} : vector<16x16xbf16>, vector<16x16xbf16>, vector<16x16xf32> -> vector<16x16xf32>
    %74 = arith.addf %73, %11 : vector<16x16xf32>
    %cst_36 = arith.constant dense<0xFF800000> : vector<16xf32>
    %75 = vector.multi_reduction <maximumf>, %74, %cst_36 [1] : vector<16x16xf32> to vector<16xf32>
    %76 = vector.shape_cast %75 : vector<16xf32> to vector<16x1xf32>
    %77 = vector.broadcast %76 : vector<16x1xf32> to vector<16x16xf32>
    %78 = arith.subf %74, %77 : vector<16x16xf32>
    %79 = math.exp %78 : vector<16x16xf32>
    %cst_37 = arith.constant dense<0.000000e+00> : vector<16xf32>
    %80 = vector.multi_reduction <add>, %79, %cst_37 [1] : vector<16x16xf32> to vector<16xf32>
    %81 = vector.shape_cast %80 : vector<16xf32> to vector<16x1xf32>
    %82 = tpu.reciprocal %81 {approx = true} : vector<16x1xf32> -> vector<16x1xf32>
    %83 = vector.broadcast %82 : vector<16x1xf32> to vector<16x16xf32>
    %84 = arith.mulf %79, %83 : vector<16x16xf32>
    %85 = arith.truncf %84 : vector<16x16xf32> to vector<16x16xbf16>
    %86 = vector.extract_strided_slice %51 {offsets = [0, 16], sizes = [16, 16], strides = [1, 1]} : vector<16x64xbf16> to vector<16x16xbf16>
    %cst_38 = arith.constant dense<0.000000e+00> : vector<16x16xf32>
    %87 = tpu.matmul %85, %86, %cst_38 {dimension_numbers = #tpu.dot_dimension_numbers<[1], [0], [0], [1], [0, 0, 1, 1], [], []>} : vector<16x16xbf16>, vector<16x16xbf16>, vector<16x16xf32> -> vector<16x16xf32>
    %88 = vector.extract_strided_slice %48 {offsets = [0, 32], sizes = [16, 16], strides = [1, 1]} : vector<16x64xbf16> to vector<16x16xbf16>
    %89 = vector.extract_strided_slice %49 {offsets = [0, 32], sizes = [16, 16], strides = [1, 1]} : vector<16x64xbf16> to vector<16x16xbf16>
    %90 = tpu.transpose %89, [1, 0] : vector<16x16xbf16> -> vector<16x16xbf16>
    %cst_39 = arith.constant dense<0.000000e+00> : vector<16x16xf32>
    %91 = tpu.matmul %88, %90, %cst_39 {dimension_numbers = #tpu.dot_dimension_numbers<[1], [0], [0], [1], [0, 0, 1, 1], [], []>} : vector<16x16xbf16>, vector<16x16xbf16>, vector<16x16xf32> -> vector<16x16xf32>
    %92 = arith.addf %91, %11 : vector<16x16xf32>
    %cst_40 = arith.constant dense<0xFF800000> : vector<16xf32>
    %93 = vector.multi_reduction <maximumf>, %92, %cst_40 [1] : vector<16x16xf32> to vector<16xf32>
    %94 = vector.shape_cast %93 : vector<16xf32> to vector<16x1xf32>
    %95 = vector.broadcast %94 : vector<16x1xf32> to vector<16x16xf32>
    %96 = arith.subf %92, %95 : vector<16x16xf32>
    %97 = math.exp %96 : vector<16x16xf32>
    %cst_41 = arith.constant dense<0.000000e+00> : vector<16xf32>
    %98 = vector.multi_reduction <add>, %97, %cst_41 [1] : vector<16x16xf32> to vector<16xf32>
    %99 = vector.shape_cast %98 : vector<16xf32> to vector<16x1xf32>
    %100 = tpu.reciprocal %99 {approx = true} : vector<16x1xf32> -> vector<16x1xf32>
    %101 = vector.broadcast %100 : vector<16x1xf32> to vector<16x16xf32>
    %102 = arith.mulf %97, %101 : vector<16x16xf32>
    %103 = arith.truncf %102 : vector<16x16xf32> to vector<16x16xbf16>
    %104 = vector.extract_strided_slice %51 {offsets = [0, 32], sizes = [16, 16], strides = [1, 1]} : vector<16x64xbf16> to vector<16x16xbf16>
    %cst_42 = arith.constant dense<0.000000e+00> : vector<16x16xf32>
    %105 = tpu.matmul %103, %104, %cst_42 {dimension_numbers = #tpu.dot_dimension_numbers<[1], [0], [0], [1], [0, 0, 1, 1], [], []>} : vector<16x16xbf16>, vector<16x16xbf16>, vector<16x16xf32> -> vector<16x16xf32>
    %106 = vector.extract_strided_slice %48 {offsets = [0, 48], sizes = [16, 16], strides = [1, 1]} : vector<16x64xbf16> to vector<16x16xbf16>
    %107 = vector.extract_strided_slice %49 {offsets = [0, 48], sizes = [16, 16], strides = [1, 1]} : vector<16x64xbf16> to vector<16x16xbf16>
    %108 = tpu.transpose %107, [1, 0] : vector<16x16xbf16> -> vector<16x16xbf16>
    %cst_43 = arith.constant dense<0.000000e+00> : vector<16x16xf32>
    %109 = tpu.matmul %106, %108, %cst_43 {dimension_numbers = #tpu.dot_dimension_numbers<[1], [0], [0], [1], [0, 0, 1, 1], [], []>} : vector<16x16xbf16>, vector<16x16xbf16>, vector<16x16xf32> -> vector<16x16xf32>
    %110 = arith.addf %109, %11 : vector<16x16xf32>
    %cst_44 = arith.constant dense<0xFF800000> : vector<16xf32>
    %111 = vector.multi_reduction <maximumf>, %110, %cst_44 [1] : vector<16x16xf32> to vector<16xf32>
    %112 = vector.shape_cast %111 : vector<16xf32> to vector<16x1xf32>
    %113 = vector.broadcast %112 : vector<16x1xf32> to vector<16x16xf32>
    %114 = arith.subf %110, %113 : vector<16x16xf32>
    %115 = math.exp %114 : vector<16x16xf32>
    %cst_45 = arith.constant dense<0.000000e+00> : vector<16xf32>
    %116 = vector.multi_reduction <add>, %115, %cst_45 [1] : vector<16x16xf32> to vector<16xf32>
    %117 = vector.shape_cast %116 : vector<16xf32> to vector<16x1xf32>
    %118 = tpu.reciprocal %117 {approx = true} : vector<16x1xf32> -> vector<16x1xf32>
    %119 = vector.broadcast %118 : vector<16x1xf32> to vector<16x16xf32>
    %120 = arith.mulf %115, %119 : vector<16x16xf32>
    %121 = arith.truncf %120 : vector<16x16xf32> to vector<16x16xbf16>
    %122 = vector.extract_strided_slice %51 {offsets = [0, 48], sizes = [16, 16], strides = [1, 1]} : vector<16x64xbf16> to vector<16x16xbf16>
    %cst_46 = arith.constant dense<0.000000e+00> : vector<16x16xf32>
    %123 = tpu.matmul %121, %122, %cst_46 {dimension_numbers = #tpu.dot_dimension_numbers<[1], [0], [0], [1], [0, 0, 1, 1], [], []>} : vector<16x16xbf16>, vector<16x16xbf16>, vector<16x16xf32> -> vector<16x16xf32>
    %124 = tpu.concatenate %69, %87, %105, %123 in 1 : vector<16x16xf32>, vector<16x16xf32>, vector<16x16xf32>, vector<16x16xf32> -> vector<16x64xf32>
    %125 = arith.truncf %124 : vector<16x64xf32> to vector<16x64xbf16>
    %cst_47 = arith.constant dense<0.000000e+00> : vector<16x64xf32>
    %126 = tpu.matmul %125, %17, %cst_47 {dimension_numbers = #tpu.dot_dimension_numbers<[1], [0], [0], [1], [0, 0, 1, 1], [], []>} : vector<16x64xbf16>, vector<64x64xbf16>, vector<16x64xf32> -> vector<16x64xf32>
    %127 = arith.addf %8, %126 : vector<16x64xf32>
    %128 = arith.mulf %127, %127 : vector<16x64xf32>
    %cst_48 = arith.constant dense<0.000000e+00> : vector<16xf32>
    %129 = vector.multi_reduction <add>, %128, %cst_48 [1] : vector<16x64xf32> to vector<16xf32>
    %130 = vector.shape_cast %129 : vector<16xf32> to vector<16x1xf32>
    %cst_49 = arith.constant 6.400000e+01 : f32
    %131 = vector.broadcast %cst_49 : f32 to vector<16x1xf32>
    %132 = arith.divf %130, %131 : vector<16x1xf32>
    %cst_50 = arith.constant 9.99999974E-6 : f32
    %133 = vector.broadcast %cst_50 : f32 to vector<16x1xf32>
    %134 = arith.addf %132, %133 : vector<16x1xf32>
    %135 = math.rsqrt %134 : vector<16x1xf32>
    %136 = vector.broadcast %135 : vector<16x1xf32> to vector<16x64xf32>
    %137 = arith.mulf %127, %136 : vector<16x64xf32>
    %138 = vector.broadcast %19 : vector<1x64xf32> to vector<16x64xf32>
    %139 = arith.mulf %137, %138 : vector<16x64xf32>
    %140 = arith.truncf %139 : vector<16x64xf32> to vector<16x64xbf16>
    %cst_51 = arith.constant dense<0.000000e+00> : vector<16x256xf32>
    %141 = tpu.matmul %140, %21, %cst_51 {dimension_numbers = #tpu.dot_dimension_numbers<[1], [0], [0], [1], [0, 0, 1, 1], [], []>} : vector<16x64xbf16>, vector<64x256xbf16>, vector<16x256xf32> -> vector<16x256xf32>
    %142 = vector.extract_strided_slice %141 {offsets = [0, 0], sizes = [16, 128], strides = [1, 1]} : vector<16x256xf32> to vector<16x128xf32>
    %143 = vector.extract_strided_slice %141 {offsets = [0, 128], sizes = [16, 128], strides = [1, 1]} : vector<16x256xf32> to vector<16x128xf32>
    %cst_52 = arith.constant 0.000000e+00 : f32
    %144 = vector.broadcast %cst_52 : f32 to vector<16x128xf32>
    %145 = arith.subf %144, %142 : vector<16x128xf32>
    %146 = math.exp %145 : vector<16x128xf32>
    %cst_53 = arith.constant 1.000000e+00 : f32
    %147 = vector.broadcast %cst_53 : f32 to vector<16x128xf32>
    %148 = arith.addf %147, %146 : vector<16x128xf32>
    %149 = tpu.reciprocal %148 {approx = true} : vector<16x128xf32> -> vector<16x128xf32>
    %150 = arith.mulf %142, %149 : vector<16x128xf32>
    %151 = arith.mulf %150, %143 : vector<16x128xf32>
    %152 = arith.truncf %151 : vector<16x128xf32> to vector<16x128xbf16>
    %cst_54 = arith.constant dense<0.000000e+00> : vector<16x64xf32>
    %153 = tpu.matmul %152, %23, %cst_54 {dimension_numbers = #tpu.dot_dimension_numbers<[1], [0], [0], [1], [0, 0, 1, 1], [], []>} : vector<16x128xbf16>, vector<128x64xbf16>, vector<16x64xf32> -> vector<16x64xf32>
    %154 = arith.addf %127, %153 : vector<16x64xf32>
    %c1 = arith.constant 1 : index
    %c0_55 = arith.constant 0 : index
    %c0_56 = arith.constant 0 : index
    %155 = vector.load %arg3[%c1, %c0_55, %c0_56] : memref<2x1x64xf32, #tpu.memory_space<vmem>>, vector<1x1x64xf32>
    %156 = vector.shape_cast %155 : vector<1x1x64xf32> to vector<1x64xf32>
    %c1_57 = arith.constant 1 : index
    %c0_58 = arith.constant 0 : index
    %c0_59 = arith.constant 0 : index
    %157 = vector.load %arg4[%c1_57, %c0_58, %c0_59] : memref<2x64x320xbf16, #tpu.memory_space<vmem>>, vector<1x64x320xbf16>
    %158 = vector.shape_cast %157 : vector<1x64x320xbf16> to vector<64x320xbf16>
    %c1_60 = arith.constant 1 : index
    %c0_61 = arith.constant 0 : index
    %c0_62 = arith.constant 0 : index
    %159 = vector.load %arg5[%c1_60, %c0_61, %c0_62] : memref<2x64x64xbf16, #tpu.memory_space<vmem>>, vector<1x64x64xbf16>
    %160 = vector.shape_cast %159 : vector<1x64x64xbf16> to vector<64x64xbf16>
    %c1_63 = arith.constant 1 : index
    %c0_64 = arith.constant 0 : index
    %c0_65 = arith.constant 0 : index
    %161 = vector.load %arg6[%c1_63, %c0_64, %c0_65] : memref<2x1x64xf32, #tpu.memory_space<vmem>>, vector<1x1x64xf32>
    %162 = vector.shape_cast %161 : vector<1x1x64xf32> to vector<1x64xf32>
    %c1_66 = arith.constant 1 : index
    %c0_67 = arith.constant 0 : index
    %c0_68 = arith.constant 0 : index
    %163 = vector.load %arg7[%c1_66, %c0_67, %c0_68] : memref<2x64x256xbf16, #tpu.memory_space<vmem>>, vector<1x64x256xbf16>
    %164 = vector.shape_cast %163 : vector<1x64x256xbf16> to vector<64x256xbf16>
    %c1_69 = arith.constant 1 : index
    %c0_70 = arith.constant 0 : index
    %c0_71 = arith.constant 0 : index
    %165 = vector.load %arg8[%c1_69, %c0_70, %c0_71] : memref<2x128x64xbf16, #tpu.memory_space<vmem>>, vector<1x128x64xbf16>
    %166 = vector.shape_cast %165 : vector<1x128x64xbf16> to vector<128x64xbf16>
    %167 = arith.mulf %154, %154 : vector<16x64xf32>
    %cst_72 = arith.constant dense<0.000000e+00> : vector<16xf32>
    %168 = vector.multi_reduction <add>, %167, %cst_72 [1] : vector<16x64xf32> to vector<16xf32>
    %169 = vector.shape_cast %168 : vector<16xf32> to vector<16x1xf32>
    %cst_73 = arith.constant 6.400000e+01 : f32
    %170 = vector.broadcast %cst_73 : f32 to vector<16x1xf32>
    %171 = arith.divf %169, %170 : vector<16x1xf32>
    %cst_74 = arith.constant 9.99999974E-6 : f32
    %172 = vector.broadcast %cst_74 : f32 to vector<16x1xf32>
    %173 = arith.addf %171, %172 : vector<16x1xf32>
    %174 = math.rsqrt %173 : vector<16x1xf32>
    %175 = vector.broadcast %174 : vector<16x1xf32> to vector<16x64xf32>
    %176 = arith.mulf %154, %175 : vector<16x64xf32>
    %177 = vector.broadcast %156 : vector<1x64xf32> to vector<16x64xf32>
    %178 = arith.mulf %176, %177 : vector<16x64xf32>
    %179 = arith.truncf %178 : vector<16x64xf32> to vector<16x64xbf16>
    %cst_75 = arith.constant dense<0.000000e+00> : vector<16x320xf32>
    %180 = tpu.matmul %179, %158, %cst_75 {dimension_numbers = #tpu.dot_dimension_numbers<[1], [0], [0], [1], [0, 0, 1, 1], [], []>} : vector<16x64xbf16>, vector<64x320xbf16>, vector<16x320xf32> -> vector<16x320xf32>
    %181 = vector.extract_strided_slice %180 {offsets = [0, 0], sizes = [16, 64], strides = [1, 1]} : vector<16x320xf32> to vector<16x64xf32>
    %182 = arith.mulf %181, %9 : vector<16x64xf32>
    %183 = vector.extract_strided_slice %180 {offsets = [0, 64], sizes = [16, 64], strides = [1, 1]} : vector<16x320xf32> to vector<16x64xf32>
    %184 = arith.mulf %183, %10 : vector<16x64xf32>
    %185 = arith.addf %182, %184 : vector<16x64xf32>
    %186 = vector.extract_strided_slice %180 {offsets = [0, 128], sizes = [16, 64], strides = [1, 1]} : vector<16x320xf32> to vector<16x64xf32>
    %187 = arith.mulf %186, %9 : vector<16x64xf32>
    %188 = vector.extract_strided_slice %180 {offsets = [0, 192], sizes = [16, 64], strides = [1, 1]} : vector<16x320xf32> to vector<16x64xf32>
    %189 = arith.mulf %188, %10 : vector<16x64xf32>
    %190 = arith.addf %187, %189 : vector<16x64xf32>
    %191 = arith.truncf %185 : vector<16x64xf32> to vector<16x64xbf16>
    %192 = arith.truncf %190 : vector<16x64xf32> to vector<16x64xbf16>
    %193 = vector.extract_strided_slice %180 {offsets = [0, 256], sizes = [16, 64], strides = [1, 1]} : vector<16x320xf32> to vector<16x64xf32>
    %194 = arith.truncf %193 : vector<16x64xf32> to vector<16x64xbf16>
    %195 = vector.extract_strided_slice %191 {offsets = [0, 0], sizes = [16, 16], strides = [1, 1]} : vector<16x64xbf16> to vector<16x16xbf16>
    %196 = vector.extract_strided_slice %192 {offsets = [0, 0], sizes = [16, 16], strides = [1, 1]} : vector<16x64xbf16> to vector<16x16xbf16>
    %197 = tpu.transpose %196, [1, 0] : vector<16x16xbf16> -> vector<16x16xbf16>
    %cst_76 = arith.constant dense<0.000000e+00> : vector<16x16xf32>
    %198 = tpu.matmul %195, %197, %cst_76 {dimension_numbers = #tpu.dot_dimension_numbers<[1], [0], [0], [1], [0, 0, 1, 1], [], []>} : vector<16x16xbf16>, vector<16x16xbf16>, vector<16x16xf32> -> vector<16x16xf32>
    %199 = arith.addf %198, %11 : vector<16x16xf32>
    %cst_77 = arith.constant dense<0xFF800000> : vector<16xf32>
    %200 = vector.multi_reduction <maximumf>, %199, %cst_77 [1] : vector<16x16xf32> to vector<16xf32>
    %201 = vector.shape_cast %200 : vector<16xf32> to vector<16x1xf32>
    %202 = vector.broadcast %201 : vector<16x1xf32> to vector<16x16xf32>
    %203 = arith.subf %199, %202 : vector<16x16xf32>
    %204 = math.exp %203 : vector<16x16xf32>
    %cst_78 = arith.constant dense<0.000000e+00> : vector<16xf32>
    %205 = vector.multi_reduction <add>, %204, %cst_78 [1] : vector<16x16xf32> to vector<16xf32>
    %206 = vector.shape_cast %205 : vector<16xf32> to vector<16x1xf32>
    %207 = tpu.reciprocal %206 {approx = true} : vector<16x1xf32> -> vector<16x1xf32>
    %208 = vector.broadcast %207 : vector<16x1xf32> to vector<16x16xf32>
    %209 = arith.mulf %204, %208 : vector<16x16xf32>
    %210 = arith.truncf %209 : vector<16x16xf32> to vector<16x16xbf16>
    %211 = vector.extract_strided_slice %194 {offsets = [0, 0], sizes = [16, 16], strides = [1, 1]} : vector<16x64xbf16> to vector<16x16xbf16>
    %cst_79 = arith.constant dense<0.000000e+00> : vector<16x16xf32>
    %212 = tpu.matmul %210, %211, %cst_79 {dimension_numbers = #tpu.dot_dimension_numbers<[1], [0], [0], [1], [0, 0, 1, 1], [], []>} : vector<16x16xbf16>, vector<16x16xbf16>, vector<16x16xf32> -> vector<16x16xf32>
    %213 = vector.extract_strided_slice %191 {offsets = [0, 16], sizes = [16, 16], strides = [1, 1]} : vector<16x64xbf16> to vector<16x16xbf16>
    %214 = vector.extract_strided_slice %192 {offsets = [0, 16], sizes = [16, 16], strides = [1, 1]} : vector<16x64xbf16> to vector<16x16xbf16>
    %215 = tpu.transpose %214, [1, 0] : vector<16x16xbf16> -> vector<16x16xbf16>
    %cst_80 = arith.constant dense<0.000000e+00> : vector<16x16xf32>
    %216 = tpu.matmul %213, %215, %cst_80 {dimension_numbers = #tpu.dot_dimension_numbers<[1], [0], [0], [1], [0, 0, 1, 1], [], []>} : vector<16x16xbf16>, vector<16x16xbf16>, vector<16x16xf32> -> vector<16x16xf32>
    %217 = arith.addf %216, %11 : vector<16x16xf32>
    %cst_81 = arith.constant dense<0xFF800000> : vector<16xf32>
    %218 = vector.multi_reduction <maximumf>, %217, %cst_81 [1] : vector<16x16xf32> to vector<16xf32>
    %219 = vector.shape_cast %218 : vector<16xf32> to vector<16x1xf32>
    %220 = vector.broadcast %219 : vector<16x1xf32> to vector<16x16xf32>
    %221 = arith.subf %217, %220 : vector<16x16xf32>
    %222 = math.exp %221 : vector<16x16xf32>
    %cst_82 = arith.constant dense<0.000000e+00> : vector<16xf32>
    %223 = vector.multi_reduction <add>, %222, %cst_82 [1] : vector<16x16xf32> to vector<16xf32>
    %224 = vector.shape_cast %223 : vector<16xf32> to vector<16x1xf32>
    %225 = tpu.reciprocal %224 {approx = true} : vector<16x1xf32> -> vector<16x1xf32>
    %226 = vector.broadcast %225 : vector<16x1xf32> to vector<16x16xf32>
    %227 = arith.mulf %222, %226 : vector<16x16xf32>
    %228 = arith.truncf %227 : vector<16x16xf32> to vector<16x16xbf16>
    %229 = vector.extract_strided_slice %194 {offsets = [0, 16], sizes = [16, 16], strides = [1, 1]} : vector<16x64xbf16> to vector<16x16xbf16>
    %cst_83 = arith.constant dense<0.000000e+00> : vector<16x16xf32>
    %230 = tpu.matmul %228, %229, %cst_83 {dimension_numbers = #tpu.dot_dimension_numbers<[1], [0], [0], [1], [0, 0, 1, 1], [], []>} : vector<16x16xbf16>, vector<16x16xbf16>, vector<16x16xf32> -> vector<16x16xf32>
    %231 = vector.extract_strided_slice %191 {offsets = [0, 32], sizes = [16, 16], strides = [1, 1]} : vector<16x64xbf16> to vector<16x16xbf16>
    %232 = vector.extract_strided_slice %192 {offsets = [0, 32], sizes = [16, 16], strides = [1, 1]} : vector<16x64xbf16> to vector<16x16xbf16>
    %233 = tpu.transpose %232, [1, 0] : vector<16x16xbf16> -> vector<16x16xbf16>
    %cst_84 = arith.constant dense<0.000000e+00> : vector<16x16xf32>
    %234 = tpu.matmul %231, %233, %cst_84 {dimension_numbers = #tpu.dot_dimension_numbers<[1], [0], [0], [1], [0, 0, 1, 1], [], []>} : vector<16x16xbf16>, vector<16x16xbf16>, vector<16x16xf32> -> vector<16x16xf32>
    %235 = arith.addf %234, %11 : vector<16x16xf32>
    %cst_85 = arith.constant dense<0xFF800000> : vector<16xf32>
    %236 = vector.multi_reduction <maximumf>, %235, %cst_85 [1] : vector<16x16xf32> to vector<16xf32>
    %237 = vector.shape_cast %236 : vector<16xf32> to vector<16x1xf32>
    %238 = vector.broadcast %237 : vector<16x1xf32> to vector<16x16xf32>
    %239 = arith.subf %235, %238 : vector<16x16xf32>
    %240 = math.exp %239 : vector<16x16xf32>
    %cst_86 = arith.constant dense<0.000000e+00> : vector<16xf32>
    %241 = vector.multi_reduction <add>, %240, %cst_86 [1] : vector<16x16xf32> to vector<16xf32>
    %242 = vector.shape_cast %241 : vector<16xf32> to vector<16x1xf32>
    %243 = tpu.reciprocal %242 {approx = true} : vector<16x1xf32> -> vector<16x1xf32>
    %244 = vector.broadcast %243 : vector<16x1xf32> to vector<16x16xf32>
    %245 = arith.mulf %240, %244 : vector<16x16xf32>
    %246 = arith.truncf %245 : vector<16x16xf32> to vector<16x16xbf16>
    %247 = vector.extract_strided_slice %194 {offsets = [0, 32], sizes = [16, 16], strides = [1, 1]} : vector<16x64xbf16> to vector<16x16xbf16>
    %cst_87 = arith.constant dense<0.000000e+00> : vector<16x16xf32>
    %248 = tpu.matmul %246, %247, %cst_87 {dimension_numbers = #tpu.dot_dimension_numbers<[1], [0], [0], [1], [0, 0, 1, 1], [], []>} : vector<16x16xbf16>, vector<16x16xbf16>, vector<16x16xf32> -> vector<16x16xf32>
    %249 = vector.extract_strided_slice %191 {offsets = [0, 48], sizes = [16, 16], strides = [1, 1]} : vector<16x64xbf16> to vector<16x16xbf16>
    %250 = vector.extract_strided_slice %192 {offsets = [0, 48], sizes = [16, 16], strides = [1, 1]} : vector<16x64xbf16> to vector<16x16xbf16>
    %251 = tpu.transpose %250, [1, 0] : vector<16x16xbf16> -> vector<16x16xbf16>
    %cst_88 = arith.constant dense<0.000000e+00> : vector<16x16xf32>
    %252 = tpu.matmul %249, %251, %cst_88 {dimension_numbers = #tpu.dot_dimension_numbers<[1], [0], [0], [1], [0, 0, 1, 1], [], []>} : vector<16x16xbf16>, vector<16x16xbf16>, vector<16x16xf32> -> vector<16x16xf32>
    %253 = arith.addf %252, %11 : vector<16x16xf32>
    %cst_89 = arith.constant dense<0xFF800000> : vector<16xf32>
    %254 = vector.multi_reduction <maximumf>, %253, %cst_89 [1] : vector<16x16xf32> to vector<16xf32>
    %255 = vector.shape_cast %254 : vector<16xf32> to vector<16x1xf32>
    %256 = vector.broadcast %255 : vector<16x1xf32> to vector<16x16xf32>
    %257 = arith.subf %253, %256 : vector<16x16xf32>
    %258 = math.exp %257 : vector<16x16xf32>
    %cst_90 = arith.constant dense<0.000000e+00> : vector<16xf32>
    %259 = vector.multi_reduction <add>, %258, %cst_90 [1] : vector<16x16xf32> to vector<16xf32>
    %260 = vector.shape_cast %259 : vector<16xf32> to vector<16x1xf32>
    %261 = tpu.reciprocal %260 {approx = true} : vector<16x1xf32> -> vector<16x1xf32>
    %262 = vector.broadcast %261 : vector<16x1xf32> to vector<16x16xf32>
    %263 = arith.mulf %258, %262 : vector<16x16xf32>
    %264 = arith.truncf %263 : vector<16x16xf32> to vector<16x16xbf16>
    %265 = vector.extract_strided_slice %194 {offsets = [0, 48], sizes = [16, 16], strides = [1, 1]} : vector<16x64xbf16> to vector<16x16xbf16>
    %cst_91 = arith.constant dense<0.000000e+00> : vector<16x16xf32>
    %266 = tpu.matmul %264, %265, %cst_91 {dimension_numbers = #tpu.dot_dimension_numbers<[1], [0], [0], [1], [0, 0, 1, 1], [], []>} : vector<16x16xbf16>, vector<16x16xbf16>, vector<16x16xf32> -> vector<16x16xf32>
    %267 = tpu.concatenate %212, %230, %248, %266 in 1 : vector<16x16xf32>, vector<16x16xf32>, vector<16x16xf32>, vector<16x16xf32> -> vector<16x64xf32>
    %268 = arith.truncf %267 : vector<16x64xf32> to vector<16x64xbf16>
    %cst_92 = arith.constant dense<0.000000e+00> : vector<16x64xf32>
    %269 = tpu.matmul %268, %160, %cst_92 {dimension_numbers = #tpu.dot_dimension_numbers<[1], [0], [0], [1], [0, 0, 1, 1], [], []>} : vector<16x64xbf16>, vector<64x64xbf16>, vector<16x64xf32> -> vector<16x64xf32>
    %270 = arith.addf %154, %269 : vector<16x64xf32>
    %271 = arith.mulf %270, %270 : vector<16x64xf32>
    %cst_93 = arith.constant dense<0.000000e+00> : vector<16xf32>
    %272 = vector.multi_reduction <add>, %271, %cst_93 [1] : vector<16x64xf32> to vector<16xf32>
    %273 = vector.shape_cast %272 : vector<16xf32> to vector<16x1xf32>
    %cst_94 = arith.constant 6.400000e+01 : f32
    %274 = vector.broadcast %cst_94 : f32 to vector<16x1xf32>
    %275 = arith.divf %273, %274 : vector<16x1xf32>
    %cst_95 = arith.constant 9.99999974E-6 : f32
    %276 = vector.broadcast %cst_95 : f32 to vector<16x1xf32>
    %277 = arith.addf %275, %276 : vector<16x1xf32>
    %278 = math.rsqrt %277 : vector<16x1xf32>
    %279 = vector.broadcast %278 : vector<16x1xf32> to vector<16x64xf32>
    %280 = arith.mulf %270, %279 : vector<16x64xf32>
    %281 = vector.broadcast %162 : vector<1x64xf32> to vector<16x64xf32>
    %282 = arith.mulf %280, %281 : vector<16x64xf32>
    %283 = arith.truncf %282 : vector<16x64xf32> to vector<16x64xbf16>
    %cst_96 = arith.constant dense<0.000000e+00> : vector<16x256xf32>
    %284 = tpu.matmul %283, %164, %cst_96 {dimension_numbers = #tpu.dot_dimension_numbers<[1], [0], [0], [1], [0, 0, 1, 1], [], []>} : vector<16x64xbf16>, vector<64x256xbf16>, vector<16x256xf32> -> vector<16x256xf32>
    %285 = vector.extract_strided_slice %284 {offsets = [0, 0], sizes = [16, 128], strides = [1, 1]} : vector<16x256xf32> to vector<16x128xf32>
    %286 = vector.extract_strided_slice %284 {offsets = [0, 128], sizes = [16, 128], strides = [1, 1]} : vector<16x256xf32> to vector<16x128xf32>
    %cst_97 = arith.constant 0.000000e+00 : f32
    %287 = vector.broadcast %cst_97 : f32 to vector<16x128xf32>
    %288 = arith.subf %287, %285 : vector<16x128xf32>
    %289 = math.exp %288 : vector<16x128xf32>
    %cst_98 = arith.constant 1.000000e+00 : f32
    %290 = vector.broadcast %cst_98 : f32 to vector<16x128xf32>
    %291 = arith.addf %290, %289 : vector<16x128xf32>
    %292 = tpu.reciprocal %291 {approx = true} : vector<16x128xf32> -> vector<16x128xf32>
    %293 = arith.mulf %285, %292 : vector<16x128xf32>
    %294 = arith.mulf %293, %286 : vector<16x128xf32>
    %295 = arith.truncf %294 : vector<16x128xf32> to vector<16x128xbf16>
    %cst_99 = arith.constant dense<0.000000e+00> : vector<16x64xf32>
    %296 = tpu.matmul %295, %166, %cst_99 {dimension_numbers = #tpu.dot_dimension_numbers<[1], [0], [0], [1], [0, 0, 1, 1], [], []>} : vector<16x128xbf16>, vector<128x64xbf16>, vector<16x64xf32> -> vector<16x64xf32>
    %297 = arith.addf %270, %296 : vector<16x64xf32>
    %c0_100 = arith.constant 0 : index
    %c0_101 = arith.constant 0 : index
    %298 = vector.load %arg9[%c0_100, %c0_101] : memref<1x64xf32, #tpu.memory_space<vmem>>, vector<1x64xf32>
    %299 = arith.mulf %297, %297 : vector<16x64xf32>
    %cst_102 = arith.constant dense<0.000000e+00> : vector<16xf32>
    %300 = vector.multi_reduction <add>, %299, %cst_102 [1] : vector<16x64xf32> to vector<16xf32>
    %301 = vector.shape_cast %300 : vector<16xf32> to vector<16x1xf32>
    %cst_103 = arith.constant 6.400000e+01 : f32
    %302 = vector.broadcast %cst_103 : f32 to vector<16x1xf32>
    %303 = arith.divf %301, %302 : vector<16x1xf32>
    %cst_104 = arith.constant 9.99999974E-6 : f32
    %304 = vector.broadcast %cst_104 : f32 to vector<16x1xf32>
    %305 = arith.addf %303, %304 : vector<16x1xf32>
    %306 = math.rsqrt %305 : vector<16x1xf32>
    %307 = vector.broadcast %306 : vector<16x1xf32> to vector<16x64xf32>
    %308 = arith.mulf %297, %307 : vector<16x64xf32>
    %309 = vector.broadcast %298 : vector<1x64xf32> to vector<16x64xf32>
    %310 = arith.mulf %308, %309 : vector<16x64xf32>
    %311 = arith.truncf %310 : vector<16x64xf32> to vector<16x64xbf16>
    %c0_105 = arith.constant 0 : index
    %c0_106 = arith.constant 0 : index
    %312 = vector.load %arg10[%c0_105, %c0_106] : memref<64x128xbf16, #tpu.memory_space<vmem>>, vector<64x128xbf16>
    %cst_107 = arith.constant dense<0.000000e+00> : vector<16x128xf32>
    %313 = tpu.matmul %311, %312, %cst_107 {dimension_numbers = #tpu.dot_dimension_numbers<[1], [0], [0], [1], [0, 0, 1, 1], [], []>} : vector<16x64xbf16>, vector<64x128xbf16>, vector<16x128xf32> -> vector<16x128xf32>
    %c0_108 = arith.constant 0 : index
    %c0_109 = arith.constant 0 : index
    %314 = vector.load %arg14[%c0_108, %c0_109] : memref<16x128xf32, #tpu.memory_space<vmem>>, vector<16x128xf32>
    tpu.vector_store %arg14[%c0_108, %c0_109], %313 {strides = array<i32>} : memref<16x128xf32, #tpu.memory_space<vmem>>, vector<16x128xf32>,
    return
  }
  func.func @transform_0(%arg0: i32) -> (i32, i32) {
    %c0_i32 = arith.constant 0 : i32
    %c0_i32_0 = arith.constant 0 : i32
    %c0_i32_1 = arith.constant 0 : i32
    return %c0_i32, %c0_i32_0 : i32, i32
  }
  func.func @transform_1(%arg0: i32) -> (i32, i32) {
    %c0_i32 = arith.constant 0 : i32
    %c0_i32_0 = arith.constant 0 : i32
    %c0_i32_1 = arith.constant 0 : i32
    return %c0_i32, %c0_i32_0 : i32, i32
  }
  func.func @transform_2(%arg0: i32) -> (i32, i32, i32) {
    %c0_i32 = arith.constant 0 : i32
    %c0_i32_0 = arith.constant 0 : i32
    %c0_i32_1 = arith.constant 0 : i32
    %c0_i32_2 = arith.constant 0 : i32
    return %c0_i32, %c0_i32_0, %c0_i32_1 : i32, i32, i32
  }
  func.func @transform_3(%arg0: i32) -> (i32, i32, i32) {
    %c0_i32 = arith.constant 0 : i32
    %c0_i32_0 = arith.constant 0 : i32
    %c0_i32_1 = arith.constant 0 : i32
    %c0_i32_2 = arith.constant 0 : i32
    return %c0_i32, %c0_i32_0, %c0_i32_1 : i32, i32, i32
  }
  func.func @transform_4(%arg0: i32) -> (i32, i32, i32) {
    %c0_i32 = arith.constant 0 : i32
    %c0_i32_0 = arith.constant 0 : i32
    %c0_i32_1 = arith.constant 0 : i32
    %c0_i32_2 = arith.constant 0 : i32
    return %c0_i32, %c0_i32_0, %c0_i32_1 : i32, i32, i32
  }
  func.func @transform_5(%arg0: i32) -> (i32, i32, i32) {
    %c0_i32 = arith.constant 0 : i32
    %c0_i32_0 = arith.constant 0 : i32
    %c0_i32_1 = arith.constant 0 : i32
    %c0_i32_2 = arith.constant 0 : i32
    return %c0_i32, %c0_i32_0, %c0_i32_1 : i32, i32, i32
  }
  func.func @transform_6(%arg0: i32) -> (i32, i32, i32) {
    %c0_i32 = arith.constant 0 : i32
    %c0_i32_0 = arith.constant 0 : i32
    %c0_i32_1 = arith.constant 0 : i32
    %c0_i32_2 = arith.constant 0 : i32
    return %c0_i32, %c0_i32_0, %c0_i32_1 : i32, i32, i32
  }
  func.func @transform_7(%arg0: i32) -> (i32, i32, i32) {
    %c0_i32 = arith.constant 0 : i32
    %c0_i32_0 = arith.constant 0 : i32
    %c0_i32_1 = arith.constant 0 : i32
    %c0_i32_2 = arith.constant 0 : i32
    return %c0_i32, %c0_i32_0, %c0_i32_1 : i32, i32, i32
  }
  func.func @transform_8(%arg0: i32) -> (i32, i32) {
    %c0_i32 = arith.constant 0 : i32
    %c0_i32_0 = arith.constant 0 : i32
    %c0_i32_1 = arith.constant 0 : i32
    return %c0_i32, %c0_i32_0 : i32, i32
  }
  func.func @transform_9(%arg0: i32) -> (i32, i32) {
    %c0_i32 = arith.constant 0 : i32
    %c0_i32_0 = arith.constant 0 : i32
    %c0_i32_1 = arith.constant 0 : i32
    return %c0_i32, %c0_i32_0 : i32, i32
  }
  func.func @transform_10(%arg0: i32) -> (i32, i32) {
    %c0_i32 = arith.constant 0 : i32
    %c0_i32_0 = arith.constant 0 : i32
    %c0_i32_1 = arith.constant 0 : i32
    return %c0_i32, %c0_i32_0 : i32, i32
  }
  func.func @transform_11(%arg0: i32) -> (i32, i32) {
    %c0_i32 = arith.constant 0 : i32
    %c0_i32_0 = arith.constant 0 : i32
    %c0_i32_1 = arith.constant 0 : i32
    return %c0_i32, %c0_i32_0 : i32, i32
  }
  func.func @transform_12(%arg0: i32) -> (i32, i32) {
    %c0_i32 = arith.constant 0 : i32
    %c0_i32_0 = arith.constant 0 : i32
    %c0_i32_1 = arith.constant 0 : i32
    return %c0_i32, %c0_i32_0 : i32, i32
  }
  func.func @transform_13(%arg0: i32) -> (i32, i32) {
    %c0_i32 = arith.constant 0 : i32
    %c0_i32_0 = arith.constant 0 : i32
    %c0_i32_1 = arith.constant 0 : i32
    return %c0_i32, %c0_i32_0 : i32, i32
  }
}

</mosaic_0001>

<llo_original>
// kernel: forward.1
$region0: #{forward.1}
  #allocation0 [shape = 'u32[]', space=smem, size = 0x4, offset = 0x4, fixed_abs, tag = 'smem constant byte address 0x4 - core index']
  #allocation1 [shape = 'u32[144,128]{1,0:T(1,128)}', space=vmem, size = 0x12000, scoped, tag = 'internal scratch']
  %s0 = inlined_call_operand.vmem [shape: s32[16,1], index: 0, kind: input, shape index: {}]
  %s1 = inlined_call_operand.vmem [shape: bf16[128,64], index: 1, kind: input, shape index: {}]
  %s2 = inlined_call_operand.vmem [shape: f32[2,1,64], index: 2, kind: input, shape index: {}]
  %s3 = inlined_call_operand.vmem [shape: bf16[2,64,320], index: 3, kind: input, shape index: {}]
  %s4 = inlined_call_operand.hbm [shape: bf16[2,64,64], index: 4, kind: input, shape index: {}]
  %s5 = inlined_call_operand.vmem [shape: f32[2,1,64], index: 5, kind: input, shape index: {}]
  %s6 = inlined_call_operand.vmem [shape: bf16[2,64,256], index: 6, kind: input, shape index: {}]
  %s7 = inlined_call_operand.vmem [shape: bf16[2,128,64], index: 7, kind: input, shape index: {}]
  %s8 = inlined_call_operand.vmem [shape: f32[1,64], index: 8, kind: input, shape index: {}]
  %s9 = inlined_call_operand.hbm [shape: bf16[64,128], index: 9, kind: input, shape index: {}]
  %s10 = inlined_call_operand.hbm [shape: f32[16,64], index: 10, kind: input, shape index: {}]
  %s11 = inlined_call_operand.hbm [shape: f32[16,64], index: 11, kind: input, shape index: {}]
  %s12 = inlined_call_operand.hbm [shape: f32[16,16], index: 12, kind: input, shape index: {}]
  %s13 = inlined_call_operand.hbm [shape: f32[16,128], index: 13, kind: output, shape index: {}]
  %s14 = sld [smem:[#allocation0]]
  $region82: #{forward.1} parent=0
    _
  %s16 = ssub.s32 1, %s14
  %s17 = scalar_select 0, %s16, %s14
  $region1: #{forward.1} parent=0
    #allocation2 [shape = 'u8[32768]{0}', space=vmem, size = 0x8000, scoped, tag = 'input window, operand 4, single buffered']
    #allocation3 [shape = 's32[1]{0}', space=sflag, size = 0x4, scoped, tag = 'scoped memory for forward.1']
    #allocation4 [shape = 's32[1]{0}', space=sflag, size = 0x4, scoped, tag = 'scoped memory for forward.1']
    #allocation5 [shape = 'u8[16384]{0}', space=vmem, size = 0x4000, scoped, tag = 'input window, operand 9, single buffered']
    #allocation6 [shape = 's32[1]{0}', space=sflag, size = 0x4, scoped, tag = 'scoped memory for forward.1']
    #allocation7 [shape = 'u8[8192]{0}', space=vmem, size = 0x2000, scoped, tag = 'input window, operand 10, single buffered']
    #allocation8 [shape = 'u8[8192]{0}', space=vmem, size = 0x2000, scoped, tag = 'input window, operand 11, single buffered']
    #allocation9 [shape = 's32[1]{0}', space=sflag, size = 0x4, scoped, tag = 'scoped memory for forward.1']
    #allocation10 [shape = 'u8[8192]{0}', space=vmem, size = 0x2000, scoped, tag = 'input window, operand 12, single buffered']
    #allocation11 [shape = 'u8[8192]{0}', space=vmem, size = 0x2000, scoped, tag = 'output window, operand 0, single buffered']
    %18 = vsyncpa [#allocation3], 0
    %19 = vsyncpa [#allocation6], 0
    %20 = vsyncpa [#allocation9], 0
    %21 = vsyncpa [#allocation4], 0
    // Predicated region
    $region2: #{forward.1} parent=1 // pred_check
      _
    $region3: #{forward.1} parent=1 // pred_check_branch
      %23 = sbr.rel (0) target = $region5
    $region4: #{forward.1} parent=1 // pred_region
      _
    $region5: #{forward.1} parent=1 // pred_fallthru
      _
    // Predicated region
    $region6: #{forward.1} parent=1 // pred_check
      _
    $region7: #{forward.1} parent=1 // pred_check_branch
      %25 = sbr.rel (0) target = $region9
    $region8: #{forward.1} parent=1 // pred_region
      _
    $region9: #{forward.1} parent=1 // pred_fallthru
      _
    // Predicated region
    $region10: #{forward.1} parent=1 // pred_check
      _
    $region11: #{forward.1} parent=1 // pred_check_branch
      %27 = sbr.rel (0) target = $region13
    $region12: #{forward.1} parent=1 // pred_region
      _
    $region13: #{forward.1} parent=1 // pred_fallthru
      _
    // Predicated region
    $region14: #{forward.1} parent=1 // pred_check
      _
    $region15: #{forward.1} parent=1 // pred_check_branch
      %29 = sbr.rel (0) target = $region17
    $region16: #{forward.1} parent=1 // pred_region
      _
    $region17: #{forward.1} parent=1 // pred_fallthru
      _
    // Predicated region
    $region18: #{forward.1} parent=1 // pred_check
      _
    $region19: #{forward.1} parent=1 // pred_check_branch
      %31 = sbr.rel (0) target = $region21
    $region20: #{forward.1} parent=1 // pred_region
      %s33 = ssub.s32 1024, 1024
      %34 = vsyncadd [#allocation3], %s33
      %s35 = sshll.u32 [#allocation2], 4
      %s36 = int_to_ptr.vmem [resolvable:$true] %s35
      %41 = dma.hbm_to_vmem [thread:$0]  %s4, 1024, %s36, [#allocation3], 64, 64, 4
    $region21: #{forward.1} parent=1 // pred_fallthru
      _
    // Predicated region
    $region22: #{forward.1} parent=1 // pred_check
      _
    $region23: #{forward.1} parent=1 // pred_check_branch
      %43 = sbr.rel (0) target = $region25
    $region24: #{forward.1} parent=1 // pred_region
      _
    $region25: #{forward.1} parent=1 // pred_fallthru
      _
    // Predicated region
    $region26: #{forward.1} parent=1 // pred_check
      _
    $region27: #{forward.1} parent=1 // pred_check_branch
      %45 = sbr.rel (0) target = $region29
    $region28: #{forward.1} parent=1 // pred_region
      _
    $region29: #{forward.1} parent=1 // pred_fallthru
      _
    // Predicated region
    $region30: #{forward.1} parent=1 // pred_check
      _
    $region31: #{forward.1} parent=1 // pred_check_branch
      %47 = sbr.rel (0) target = $region33
    $region32: #{forward.1} parent=1 // pred_region
      _
    $region33: #{forward.1} parent=1 // pred_fallthru
      _
    // Predicated region
    $region34: #{forward.1} parent=1 // pred_check
      _
    $region35: #{forward.1} parent=1 // pred_check_branch
      %49 = sbr.rel (0) target = $region37
    $region36: #{forward.1} parent=1 // pred_region
      _
    $region37: #{forward.1} parent=1 // pred_fallthru
      _
    // Predicated region
    $region38: #{forward.1} parent=1 // pred_check
      _
    $region39: #{forward.1} parent=1 // pred_check_branch
      %51 = sbr.rel (0) target = $region41
    $region40: #{forward.1} parent=1 // pred_region
      %s53 = ssub.s32 512, 512
      %54 = vsyncadd [#allocation6], %s53
      %s55 = sshll.u32 [#allocation5], 4
      %s56 = int_to_ptr.vmem [resolvable:$true] %s55
      %61 = dma.hbm_to_vmem [thread:$0]  %s9, 512, %s56, [#allocation6], 64, 64, 4
    $region41: #{forward.1} parent=1 // pred_fallthru
      _
    // Predicated region
    $region42: #{forward.1} parent=1 // pred_check
      _
    $region43: #{forward.1} parent=1 // pred_check_branch
      %63 = sbr.rel (0) target = $region45
    $region44: #{forward.1} parent=1 // pred_region
      %s65 = ssub.s32 256, 256
      %66 = vsyncadd [#allocation6], %s65
      %s67 = sshll.u32 [#allocation7], 4
      %s68 = int_to_ptr.vmem [resolvable:$true] %s67
      %73 = dma.hbm_to_vmem [thread:$0]  %s10, 256, %s68, [#allocation6], 128, 128, 8
    $region45: #{forward.1} parent=1 // pred_fallthru
      _
    // Predicated region
    $region46: #{forward.1} parent=1 // pred_check
      _
    $region47: #{forward.1} parent=1 // pred_check_branch
      %75 = sbr.rel (0) target = $region49
    $region48: #{forward.1} parent=1 // pred_region
      %s77 = ssub.s32 256, 256
      %78 = vsyncadd [#allocation9], %s77
      %s79 = sshll.u32 [#allocation8], 4
      %s80 = int_to_ptr.vmem [resolvable:$true] %s79
      %85 = dma.hbm_to_vmem [thread:$0]  %s11, 256, %s80, [#allocation9], 128, 128, 8
    $region49: #{forward.1} parent=1 // pred_fallthru
      _
    // Predicated region
    $region50: #{forward.1} parent=1 // pred_check
      _
    $region51: #{forward.1} parent=1 // pred_check_branch
      %87 = sbr.rel (0) target = $region53
    $region52: #{forward.1} parent=1 // pred_region
      %s89 = ssub.s32 256, 256
      %90 = vsyncadd [#allocation9], %s89
      %s91 = sshll.u32 [#allocation10], 4
      %s92 = int_to_ptr.vmem [resolvable:$true] %s91
      %97 = dma.hbm_to_vmem [thread:$0]  %s12, 256, %s92, [#allocation9], 128, 128, 8
    $region53: #{forward.1} parent=1 // pred_fallthru
      _
    // Predicated region
    $region54: #{forward.1} parent=1 // pred_check
      _
    $region55: #{forward.1} parent=1 // pred_check_branch
      %99 = sbr.rel (0) target = $region57
    $region56: #{forward.1} parent=1 // pred_region
      %100 = dma.done [#allocation3], 1024
    $region57: #{forward.1} parent=1 // pred_fallthru
      _
    // Predicated region
    $region58: #{forward.1} parent=1 // pred_check
      _
    $region59: #{forward.1} parent=1 // pred_check_branch
      %102 = sbr.rel (0) target = $region61
    $region60: #{forward.1} parent=1 // pred_region
      %103 = dma.done [#allocation6], 512
    $region61: #{forward.1} parent=1 // pred_fallthru
      _
    // Predicated region
    $region62: #{forward.1} parent=1 // pred_check
      _
    $region63: #{forward.1} parent=1 // pred_check_branch
      %105 = sbr.rel (0) target = $region65
    $region64: #{forward.1} parent=1 // pred_region
      %106 = dma.done [#allocation6], 256
    $region65: #{forward.1} parent=1 // pred_fallthru
      _
    // Predicated region
    $region66: #{forward.1} parent=1 // pred_check
      _
    $region67: #{forward.1} parent=1 // pred_check_branch
      %108 = sbr.rel (0) target = $region69
    $region68: #{forward.1} parent=1 // pred_region
      %109 = dma.done [#allocation9], 256
    $region69: #{forward.1} parent=1 // pred_fallthru
      _
    // Predicated region
    $region70: #{forward.1} parent=1 // pred_check
      _
    $region71: #{forward.1} parent=1 // pred_check_branch
      %111 = sbr.rel (0) target = $region73
    $region72: #{forward.1} parent=1 // pred_region
      %112 = dma.done [#allocation9], 256
    $region73: #{forward.1} parent=1 // pred_fallthru
      _
    %v114 = vld [vmem:[%s0] sm:$0xff]
    %v115 = vld [vmem:[%s0 + $0x8] sm:$0xff]
    %v116 = vlaneseq
    %v117 = vand.u32 %v116, 127
    %118 = vset.pattern.permute.xlu0 0
    %119 = vperm.xlu0 %118, %v114
    %v120 = vpop.permute.xlu0 %119
    %121 = vset.pattern.permute.xlu0 0
    %122 = vperm.xlu0 %121, %v115
    %v123 = vpop.permute.xlu0 %122
    %vm124 = vcmp.eq.s32.totalorder %v117, %v120
    %vm125 = vcmp.eq.s32.totalorder %v117, %v123
    %v126 = vsel %vm124, 1, 0
    %v127 = vsel %vm125, 1, 0
    %v128 = vcvt.s32.f32 %v126
    %v129 = vcvt.s32.f32 %v127
    %v130 = vpack.c.bf16 %v129, %v128
    %v131 = vld [vmem:[%s1] sm:$0xf]
    %v132 = vld [vmem:[%s1 + $0x4] sm:$0xf]
    %v133 = vld [vmem:[%s1 + $0x8] sm:$0xf]
    %v134 = vld [vmem:[%s1 + $0xc] sm:$0xf]
    %v135 = vld [vmem:[%s1 + $0x10] sm:$0xf]
    %v136 = vld [vmem:[%s1 + $0x14] sm:$0xf]
    %v137 = vld [vmem:[%s1 + $0x18] sm:$0xf]
    %v138 = vld [vmem:[%s1 + $0x1c] sm:$0xf]
    %v139 = vld [vmem:[%s1 + $0x20] sm:$0xf]
    %v140 = vld [vmem:[%s1 + $0x24] sm:$0xf]
    %v141 = vld [vmem:[%s1 + $0x28] sm:$0xf]
    %v142 = vld [vmem:[%s1 + $0x2c] sm:$0xf]
    %v143 = vld [vmem:[%s1 + $0x30] sm:$0xf]
    %v144 = vld [vmem:[%s1 + $0x34] sm:$0xf]
    %v145 = vld [vmem:[%s1 + $0x38] sm:$0xf]
    %v146 = vld [vmem:[%s1 + $0x3c] sm:$0xf]
    %v163 = vunpack.c.l.b16 %v131
    %v164 = vunpack.c.l.b16 %v132
    %v165 = vunpack.c.l.b16 %v133
    %v166 = vunpack.c.l.b16 %v134
    %v167 = vunpack.c.l.b16 %v135
    %v168 = vunpack.c.l.b16 %v136
    %v169 = vunpack.c.l.b16 %v137
    %v170 = vunpack.c.l.b16 %v138
    %v171 = vunpack.c.l.b16 %v139
    %v172 = vunpack.c.l.b16 %v140
    %v173 = vunpack.c.l.b16 %v141
    %v174 = vunpack.c.l.b16 %v142
    %v175 = vunpack.c.l.b16 %v143
    %v176 = vunpack.c.l.b16 %v144
    %v177 = vunpack.c.l.b16 %v145
    %v178 = vunpack.c.l.b16 %v146
    %v179 = vpack.c.b16 %v164, %v163
    %v180 = vpack.c.b16 %v166, %v165
    %v181 = vpack.c.b16 %v168, %v167
    %v182 = vpack.c.b16 %v170, %v169
    %v183 = vpack.c.b16 %v172, %v171
    %v184 = vpack.c.b16 %v174, %v173
    %v185 = vpack.c.b16 %v176, %v175
    %v186 = vpack.c.b16 %v178, %v177
    %195 = vmatprep.subr.bf16.mxu0 0
    %196 = vmatpush1.bf16.msra.mxu0 %v186
    %197 = vmatprep.subr.bf16.mxu0 0
    %198 = vmatpush1.bf16.msra.mxu0 %v185
    %199 = vmatprep.subr.bf16.mxu0 0
    %200 = vmatpush1.bf16.msra.mxu0 %v184
    %201 = vmatprep.subr.bf16.mxu0 0
    %202 = vmatpush1.bf16.msra.mxu0 %v183
    %203 = vmatprep.subr.bf16.mxu0 0
    %204 = vmatpush1.bf16.msra.mxu0 %v182
    %205 = vmatprep.subr.bf16.mxu0 0
    %206 = vmatpush1.bf16.msra.mxu0 %v181
    %207 = vmatprep.subr.bf16.mxu0 0
    %208 = vmatpush1.bf16.msra.mxu0 %v180
    %209 = vmatprep.subr.bf16.mxu0 0
    %210 = vmatpush1.bf16.msra.mxu0 %v179
    %211 = vmatprep.subr.bf16.mxu0 0
    %212 = vmatpush2.bf16.msra.mxu0 0
    %213 = vmatprep.subr.bf16.mxu0 0
    %214 = vmatpush2.bf16.msra.mxu0 0
    %215 = vmatprep.subr.bf16.mxu0 0
    %216 = vmatpush2.bf16.msra.mxu0 0
    %217 = vmatprep.subr.bf16.mxu0 0
    %218 = vmatpush2.bf16.msra.mxu0 0
    %219 = vmatprep.subr.bf16.mxu0 0
    %220 = vmatpush2.bf16.msra.mxu0 0
    %221 = vmatprep.subr.bf16.mxu0 0
    %222 = vmatpush2.bf16.msra.mxu0 0
    %223 = vmatprep.subr.bf16.mxu0 0
    %224 = vmatpush2.bf16.msra.mxu0 0
    %225 = vmatprep.subr.bf16.mxu0 0
    %226 = vmatpush2.bf16.msra.mxu0 0
    %227 = vmatprep.mubr.bf16.mxu0 0
    %228 = vmatmul.mubr.bf16.gmra.mxu0 %v130
    %v229 = vpop.f32.mrf.mxu0
    %v230 = vadd.f32 0.0, %v229
    %v231 = vpop.f32.mrf.mxu0
    %v232 = vpop.f32.mrf.mxu0
    %v233 = vadd.f32 0.0, %v232
    %v234 = vpop.f32.mrf.mxu0
    %235 = vdwg.mxu0
    %v236 = vld [vmem:[#allocation7] sm:$0xff]
    %v237 = vld [vmem:[#allocation7 + $0x8] sm:$0xff]
    %v238 = vld [vmem:[#allocation8] sm:$0xff]
    %v239 = vld [vmem:[#allocation8 + $0x8] sm:$0xff]
    %v240 = vld [vmem:[#allocation10] sm:$0xff]
    %v241 = vld [vmem:[#allocation10 + $0x8] sm:$0xff]
    %v242 = vld [vmem:[%s2] sm:$0x1]
    %v243 = vld [vmem:[%s3] sm:$0xff]
    %v244 = vld [vmem:[%s3 + $0x8] sm:$0xf]
    %v245 = vld [vmem:[%s3 + $0xc] sm:$0xff]
    %v246 = vld [vmem:[%s3 + $0x14] sm:$0xf]
    %v247 = vld [vmem:[%s3 + $0x18] sm:$0xff]
    %v248 = vld [vmem:[%s3 + $0x20] sm:$0xf]
    %v249 = vld [vmem:[%s3 + $0x24] sm:$0xff]
    %v250 = vld [vmem:[%s3 + $0x2c] sm:$0xf]
    %v251 = vld [vmem:[%s3 + $0x30] sm:$0xff]
    %v252 = vld [vmem:[%s3 + $0x38] sm:$0xf]
    %v253 = vld [vmem:[%s3 + $0x3c] sm:$0xff]
    %v254 = vld [vmem:[%s3 + $0x44] sm:$0xf]
    %v255 = vld [vmem:[%s3 + $0x48] sm:$0xff]
    %v256 = vld [vmem:[%s3 + $0x50] sm:$0xf]
    %v257 = vld [vmem:[%s3 + $0x54] sm:$0xff]
    %v258 = vld [vmem:[%s3 + $0x5c] sm:$0xf]
    %v259 = vld [vmem:[#allocation2] sm:$0xf]
    %v260 = vld [vmem:[#allocation2 + $0x4] sm:$0xf]
    %v261 = vld [vmem:[#allocation2 + $0x8] sm:$0xf]
    %v262 = vld [vmem:[#allocation2 + $0xc] sm:$0xf]
    %v263 = vld [vmem:[#allocation2 + $0x10] sm:$0xf]
    %v264 = vld [vmem:[#allocation2 + $0x14] sm:$0xf]
    %v265 = vld [vmem:[#allocation2 + $0x18] sm:$0xf]
    %v266 = vld [vmem:[#allocation2 + $0x1c] sm:$0xf]
    %v267 = vld [vmem:[%s5] sm:$0x1]
    %v268 = vld [vmem:[%s6] sm:$0xff]
    %v269 = vld [vmem:[%s6 + $0x8] sm:$0xff]
    %v270 = vld [vmem:[%s6 + $0x10] sm:$0xff]
    %v271 = vld [vmem:[%s6 + $0x18] sm:$0xff]
    %v272 = vld [vmem:[%s6 + $0x20] sm:$0xff]
    %v273 = vld [vmem:[%s6 + $0x28] sm:$0xff]
    %v274 = vld [vmem:[%s6 + $0x30] sm:$0xff]
    %v275 = vld [vmem:[%s6 + $0x38] sm:$0xff]
    %v276 = vld [vmem:[%s7] sm:$0xf]
    %v277 = vld [vmem:[%s7 + $0x4] sm:$0xf]
    %v278 = vld [vmem:[%s7 + $0x8] sm:$0xf]
    %v279 = vld [vmem:[%s7 + $0xc] sm:$0xf]
    %v280 = vld [vmem:[%s7 + $0x10] sm:$0xf]
    %v281 = vld [vmem:[%s7 + $0x14] sm:$0xf]
    %v282 = vld [vmem:[%s7 + $0x18] sm:$0xf]
    %v283 = vld [vmem:[%s7 + $0x1c] sm:$0xf]
    %v284 = vld [vmem:[%s7 + $0x20] sm:$0xf]
    %v285 = vld [vmem:[%s7 + $0x24] sm:$0xf]
    %v286 = vld [vmem:[%s7 + $0x28] sm:$0xf]
    %v287 = vld [vmem:[%s7 + $0x2c] sm:$0xf]
    %v288 = vld [vmem:[%s7 + $0x30] sm:$0xf]
    %v289 = vld [vmem:[%s7 + $0x34] sm:$0xf]
    %v290 = vld [vmem:[%s7 + $0x38] sm:$0xf]
    %v291 = vld [vmem:[%s7 + $0x3c] sm:$0xf]
    %v292 = vmul.f32 %v230, %v230
    %v293 = vmul.f32 %v233, %v233
    %vm294 = vcmask 523264
    %v295 = vsel %vm294, %v292, 0.0
    %296 = vadd.xlane.f32.xlu0 %v295
    %v297 = vpop.xlane.xlu0 %296
    %v298 = vsel %vm294, %v293, 0.0
    %299 = vadd.xlane.f32.xlu0 %v298
    %v300 = vpop.xlane.xlu0 %299
    %v301 = vrcp.pop 64.0
    %v302 = vmul.f32 %v297, %v301
    %v303 = vmul.f32 %v300, %v301
    %v304 = vadd.f32 %v302, 1e-05
    %v305 = vadd.f32 %v303, 1e-05
    %v306 = vrsqrt.pop %v304
    %v307 = vrsqrt.pop %v305
    %v308 = vmul.f32 %v230, %v306
    %v309 = vmul.f32 %v233, %v307
    %v311 = vlaneseq
    %v312 = vshrl.u32 %v311, 7
    %v313 = vsub.s32 0, %v312
    %v314 = vrot.slane %v242, %v313
    %v316 = vmul.f32 %v308, %v314
    %v317 = vmul.f32 %v309, %v314
    %v318 = vpack.c.bf16 %v317, %v316
    %v335 = vunpack.c.l.b16 %v243
    %v336 = vunpack.c.h.b16 %v243
    %v337 = vunpack.c.l.b16 %v244
    %v338 = vunpack.c.l.b16 %v245
    %v339 = vunpack.c.h.b16 %v245
    %v340 = vunpack.c.l.b16 %v246
    %v341 = vunpack.c.l.b16 %v247
    %v342 = vunpack.c.h.b16 %v247
    %v343 = vunpack.c.l.b16 %v248
    %v344 = vunpack.c.l.b16 %v249
    %v345 = vunpack.c.h.b16 %v249
    %v346 = vunpack.c.l.b16 %v250
    %v347 = vunpack.c.l.b16 %v251
    %v348 = vunpack.c.h.b16 %v251
    %v349 = vunpack.c.l.b16 %v252
    %v350 = vunpack.c.l.b16 %v253
    %v351 = vunpack.c.h.b16 %v253
    %v352 = vunpack.c.l.b16 %v254
    %v353 = vunpack.c.l.b16 %v255
    %v354 = vunpack.c.h.b16 %v255
    %v355 = vunpack.c.l.b16 %v256
    %v356 = vunpack.c.l.b16 %v257
    %v357 = vunpack.c.h.b16 %v257
    %v358 = vunpack.c.l.b16 %v258
    %v359 = vpack.c.b16 %v338, %v335
    %v360 = vpack.c.b16 %v339, %v336
    %v361 = vpack.c.b16 %v340, %v337
    %v362 = vpack.c.b16 %v344, %v341
    %v363 = vpack.c.b16 %v345, %v342
    %v364 = vpack.c.b16 %v346, %v343
    %v365 = vpack.c.b16 %v350, %v347
    %v366 = vpack.c.b16 %v351, %v348
    %v367 = vpack.c.b16 %v352, %v349
    %v368 = vpack.c.b16 %v356, %v353
    %v369 = vpack.c.b16 %v357, %v354
    %v370 = vpack.c.b16 %v358, %v355
    %v384 = vsel %vm294, %v318, 0
    %386 = vmatprep.subr.bf16.mxu0 0
    %387 = vmatpush1.bf16.msra.mxu0 0
    %388 = vmatprep.subr.bf16.mxu0 0
    %389 = vmatpush1.bf16.msra.mxu0 0
    %390 = vmatprep.subr.bf16.mxu0 0
    %391 = vmatpush1.bf16.msra.mxu0 0
    %392 = vmatprep.subr.bf16.mxu0 0
    %393 = vmatpush1.bf16.msra.mxu0 0
    %394 = vmatprep.subr.bf16.mxu0 %v369
    %395 = vmatpush1.bf16.msra.mxu0 %v368
    %396 = vmatprep.subr.bf16.mxu0 %v366
    %397 = vmatpush1.bf16.msra.mxu0 %v365
    %398 = vmatprep.subr.bf16.mxu0 %v363
    %399 = vmatpush1.bf16.msra.mxu0 %v362
    %400 = vmatprep.subr.bf16.mxu0 %v360
    %401 = vmatpush1.bf16.msra.mxu0 %v359
    %402 = vmatprep.subr.bf16.mxu0 0
    %403 = vmatpush2.bf16.msra.mxu0 0
    %404 = vmatprep.subr.bf16.mxu0 0
    %405 = vmatpush2.bf16.msra.mxu0 0
    %406 = vmatprep.subr.bf16.mxu0 0
    %407 = vmatpush2.bf16.msra.mxu0 0
    %408 = vmatprep.subr.bf16.mxu0 0
    %409 = vmatpush2.bf16.msra.mxu0 0
    %410 = vmatprep.subr.bf16.mxu0 0
    %411 = vmatpush2.bf16.msra.mxu0 0
    %412 = vmatprep.subr.bf16.mxu0 0
    %413 = vmatpush2.bf16.msra.mxu0 0
    %414 = vmatprep.subr.bf16.mxu0 0
    %415 = vmatpush2.bf16.msra.mxu0 0
    %416 = vmatprep.subr.bf16.mxu0 0
    %417 = vmatpush2.bf16.msra.mxu0 0
    %418 = vmatprep.mubr.bf16.mxu0 0
    %419 = vmatmul.mubr.bf16.gmra.mxu0 %v384
    %v420 = vpop.f32.mrf.mxu0
    %v421 = vadd.f32 0.0, %v420
    %v422 = vpop.f32.mrf.mxu0
    %v423 = vadd.f32 0.0, %v422
    %v424 = vpop.f32.mrf.mxu0
    %v425 = vadd.f32 0.0, %v424
    %v426 = vpop.f32.mrf.mxu0
    %v427 = vadd.f32 0.0, %v426
    %428 = vdwg.mxu0
    %429 = vmatprep.subr.bf16.mxu0 0
    %430 = vmatpush1.bf16.msra.mxu0 0
    %431 = vmatprep.subr.bf16.mxu0 0
    %432 = vmatpush1.bf16.msra.mxu0 0
    %433 = vmatprep.subr.bf16.mxu0 0
    %434 = vmatpush1.bf16.msra.mxu0 0
    %435 = vmatprep.subr.bf16.mxu0 0
    %436 = vmatpush1.bf16.msra.mxu0 0
    %437 = vmatprep.subr.bf16.mxu0 0
    %438 = vmatpush1.bf16.msra.mxu0 %v370
    %439 = vmatprep.subr.bf16.mxu0 0
    %440 = vmatpush1.bf16.msra.mxu0 %v367
    %441 = vmatprep.subr.bf16.mxu0 0
    %442 = vmatpush1.bf16.msra.mxu0 %v364
    %443 = vmatprep.subr.bf16.mxu0 0
    %444 = vmatpush1.bf16.msra.mxu0 %v361
    %445 = vmatprep.subr.bf16.mxu0 0
    %446 = vmatpush2.bf16.msra.mxu0 0
    %447 = vmatprep.subr.bf16.mxu0 0
    %448 = vmatpush2.bf16.msra.mxu0 0
    %449 = vmatprep.subr.bf16.mxu0 0
    %450 = vmatpush2.bf16.msra.mxu0 0
    %451 = vmatprep.subr.bf16.mxu0 0
    %452 = vmatpush2.bf16.msra.mxu0 0
    %453 = vmatprep.subr.bf16.mxu0 0
    %454 = vmatpush2.bf16.msra.mxu0 0
    %455 = vmatprep.subr.bf16.mxu0 0
    %456 = vmatpush2.bf16.msra.mxu0 0
    %457 = vmatprep.subr.bf16.mxu0 0
    %458 = vmatpush2.bf16.msra.mxu0 0
    %459 = vmatprep.subr.bf16.mxu0 0
    %460 = vmatpush2.bf16.msra.mxu0 0
    %461 = vmatprep.mubr.bf16.mxu0 0
    %462 = vmatmul.mubr.bf16.gmra.mxu0 %v384
    %v463 = vpop.f32.mrf.mxu0
    %v464 = vadd.f32 0.0, %v463
    %v465 = vpop.f32.mrf.mxu0
    %v466 = vpop.f32.mrf.mxu0
    %v467 = vadd.f32 0.0, %v466
    %v468 = vpop.f32.mrf.mxu0
    %469 = vdwg.mxu0
    %v470 = vmul.f32 %v421, %v236
    %v471 = vmul.f32 %v425, %v237
    %474 = vrot.lane.b32.xlu0 %v238, 64
    %v475 = vpop.permute.xlu0 %474
    %476 = vrot.lane.b32.xlu0 %v239, 64
    %v477 = vpop.permute.xlu0 %476
    %v480 = vmul.f32 %v421, %v475
    %v481 = vmul.f32 %v425, %v477
    %484 = vrot.lane.b32.xlu0 %v480, 64
    %v485 = vpop.permute.xlu0 %484
    %486 = vrot.lane.b32.xlu0 %v481, 64
    %v487 = vpop.permute.xlu0 %486
    %v490 = vadd.f32 %v470, %v485
    %v491 = vadd.f32 %v471, %v487
    %v492 = vmul.f32 %v423, %v236
    %v493 = vmul.f32 %v427, %v237
    %v494 = vmul.f32 %v423, %v475
    %v495 = vmul.f32 %v427, %v477
    %498 = vrot.lane.b32.xlu0 %v494, 64
    %v499 = vpop.permute.xlu0 %498
    %500 = vrot.lane.b32.xlu0 %v495, 64
    %v501 = vpop.permute.xlu0 %500
    %v504 = vadd.f32 %v492, %v499
    %v505 = vadd.f32 %v493, %v501
    %v506 = vpack.c.bf16 %v491, %v490
    %v507 = vpack.c.bf16 %v505, %v504
    %v508 = vpack.c.bf16 %v467, %v464
    %vm509 = vcmask 130048
    %v511 = vsel %vm509, %v506, 0
    %v514 = vsel %vm509, %v507, 0
    %516 = vmatprep.subr.bf16.mxu0 0
    %517 = vmatpush1.bf16.xpose.msra.mxu0 0
    %518 = vmatprep.subr.bf16.mxu0 0
    %519 = vmatpush1.bf16.xpose.msra.mxu0 0
    %520 = vmatprep.subr.bf16.mxu0 0
    %521 = vmatpush1.bf16.xpose.msra.mxu0 0
    %522 = vmatprep.subr.bf16.mxu0 0
    %523 = vmatpush1.bf16.xpose.msra.mxu0 0
    %524 = vmatprep.subr.bf16.mxu0 0
    %525 = vmatpush1.bf16.xpose.msra.mxu0 0
    %526 = vmatprep.subr.bf16.mxu0 0
    %527 = vmatpush1.bf16.xpose.msra.mxu0 0
    %528 = vmatprep.subr.bf16.mxu0 0
    %529 = vmatpush1.bf16.xpose.msra.mxu0 0
    %530 = vmatprep.subr.bf16.mxu0 0
    %531 = vmatpush1.bf16.xpose.msra.mxu0 %v514
    %532 = vmatprep.subr.bf16.mxu0 0
    %533 = vmatpush2.bf16.xpose.msra.mxu0 0
    %534 = vmatprep.subr.bf16.mxu0 0
    %535 = vmatpush2.bf16.xpose.msra.mxu0 0
    %536 = vmatprep.subr.bf16.mxu0 0
    %537 = vmatpush2.bf16.xpose.msra.mxu0 0
    %538 = vmatprep.subr.bf16.mxu0 0
    %539 = vmatpush2.bf16.xpose.msra.mxu0 0
    %540 = vmatprep.subr.bf16.mxu0 0
    %541 = vmatpush2.bf16.xpose.msra.mxu0 0
    %542 = vmatprep.subr.bf16.mxu0 0
    %543 = vmatpush2.bf16.xpose.msra.mxu0 0
    %544 = vmatprep.subr.bf16.mxu0 0
    %545 = vmatpush2.bf16.xpose.msra.mxu0 0
    %546 = vmatprep.subr.bf16.mxu0 0
    %547 = vmatpush2.bf16.xpose.msra.mxu0 0
    %548 = vmatprep.mubr.bf16.mxu0 0
    %549 = vmatmul.mubr.bf16.gmra.mxu0 %v511
    %v550 = vpop.f32.mrf.mxu0
    %v551 = vadd.f32 %v240, %v550
    %v552 = vpop.f32.mrf.mxu0
    %v553 = vpop.f32.mrf.mxu0
    %v554 = vadd.f32 %v241, %v553
    %v555 = vpop.f32.mrf.mxu0
    %556 = vdwg.mxu0
    %v557 = vsel %vm509, %v551, -inf
    %558 = vmax.xlane.f32.xlu0 %v557
    %v559 = vpop.xlane.xlu0 %558
    %v560 = vsel %vm509, %v554, -inf
    %561 = vmax.xlane.f32.xlu0 %v560
    %v562 = vpop.xlane.xlu0 %561
    %v563 = vsub.f32 %v551, %v559
    %v564 = vsub.f32 %v554, %v562
    %v565 = vmul.f32 %v563, 1.442695
    %v566 = vpow.pop %v565
    %v567 = vmul.f32 %v564, 1.442695
    %v568 = vpow.pop %v567
    %v569 = vsel %vm509, %v566, 0.0
    %570 = vadd.xlane.f32.xlu0 %v569
    %v571 = vpop.xlane.xlu0 %570
    %v572 = vsel %vm509, %v568, 0.0
    %573 = vadd.xlane.f32.xlu0 %v572
    %v574 = vpop.xlane.xlu0 %573
    %v575 = vrcp.pop %v571
    %v576 = vrcp.pop %v574
    %v577 = vmul.f32 %v566, %v575
    %v578 = vmul.f32 %v568, %v576
    %v579 = vpack.c.bf16 %v578, %v577
    %v581 = vsel %vm509, %v579, 0
    %583 = vmatprep.subr.bf16.mxu0 0
    %584 = vmatpush1.bf16.msra.mxu0 0
    %585 = vmatprep.subr.bf16.mxu0 0
    %586 = vmatpush1.bf16.msra.mxu0 0
    %587 = vmatprep.subr.bf16.mxu0 0
    %588 = vmatpush1.bf16.msra.mxu0 0
    %589 = vmatprep.subr.bf16.mxu0 0
    %590 = vmatpush1.bf16.msra.mxu0 0
    %591 = vmatprep.subr.bf16.mxu0 0
    %592 = vmatpush1.bf16.msra.mxu0 0
    %593 = vmatprep.subr.bf16.mxu0 0
    %594 = vmatpush1.bf16.msra.mxu0 0
    %595 = vmatprep.subr.bf16.mxu0 0
    %596 = vmatpush1.bf16.msra.mxu0 0
    %597 = vmatprep.subr.bf16.mxu0 0
    %598 = vmatpush1.bf16.msra.mxu0 %v508
    %599 = vmatprep.subr.bf16.mxu0 0
    %600 = vmatpush2.bf16.msra.mxu0 0
    %601 = vmatprep.subr.bf16.mxu0 0
    %602 = vmatpush2.bf16.msra.mxu0 0
    %603 = vmatprep.subr.bf16.mxu0 0
    %604 = vmatpush2.bf16.msra.mxu0 0
    %605 = vmatprep.subr.bf16.mxu0 0
    %606 = vmatpush2.bf16.msra.mxu0 0
    %607 = vmatprep.subr.bf16.mxu0 0
    %608 = vmatpush2.bf16.msra.mxu0 0
    %609 = vmatprep.subr.bf16.mxu0 0
    %610 = vmatpush2.bf16.msra.mxu0 0
    %611 = vmatprep.subr.bf16.mxu0 0
    %612 = vmatpush2.bf16.msra.mxu0 0
    %613 = vmatprep.subr.bf16.mxu0 0
    %614 = vmatpush2.bf16.msra.mxu0 0
    %615 = vmatprep.mubr.bf16.mxu0 0
    %616 = vmatmul.mubr.bf16.gmra.mxu0 %v581
    %v617 = vpop.f32.mrf.mxu0
    %v618 = vadd.f32 0.0, %v617
    %v619 = vpop.f32.mrf.mxu0
    %v620 = vpop.f32.mrf.mxu0
    %v621 = vadd.f32 0.0, %v620
    %v622 = vpop.f32.mrf.mxu0
    %623 = vdwg.mxu0
    %625 = vrot.lane.b32.xlu0 %v506, 112
    %v626 = vpop.permute.xlu0 %625
    %628 = vrot.lane.b32.xlu0 %v507, 112
    %v629 = vpop.permute.xlu0 %628
    %v631 = vsel %vm509, %v626, 0
    %v634 = vsel %vm509, %v629, 0
    %636 = vmatprep.subr.bf16.mxu0 0
    %637 = vmatpush1.bf16.xpose.msra.mxu0 0
    %638 = vmatprep.subr.bf16.mxu0 0
    %639 = vmatpush1.bf16.xpose.msra.mxu0 0
    %640 = vmatprep.subr.bf16.mxu0 0
    %641 = vmatpush1.bf16.xpose.msra.mxu0 0
    %642 = vmatprep.subr.bf16.mxu0 0
    %643 = vmatpush1.bf16.xpose.msra.mxu0 0
    %644 = vmatprep.subr.bf16.mxu0 0
    %645 = vmatpush1.bf16.xpose.msra.mxu0 0
    %646 = vmatprep.subr.bf16.mxu0 0
    %647 = vmatpush1.bf16.xpose.msra.mxu0 0
    %648 = vmatprep.subr.bf16.mxu0 0
    %649 = vmatpush1.bf16.xpose.msra.mxu0 0
    %650 = vmatprep.subr.bf16.mxu0 0
    %651 = vmatpush1.bf16.xpose.msra.mxu0 %v634
    %652 = vmatprep.subr.bf16.mxu0 0
    %653 = vmatpush2.bf16.xpose.msra.mxu0 0
    %654 = vmatprep.subr.bf16.mxu0 0
    %655 = vmatpush2.bf16.xpose.msra.mxu0 0
    %656 = vmatprep.subr.bf16.mxu0 0
    %657 = vmatpush2.bf16.xpose.msra.mxu0 0
    %658 = vmatprep.subr.bf16.mxu0 0
    %659 = vmatpush2.bf16.xpose.msra.mxu0 0
    %660 = vmatprep.subr.bf16.mxu0 0
    %661 = vmatpush2.bf16.xpose.msra.mxu0 0
    %662 = vmatprep.subr.bf16.mxu0 0
    %663 = vmatpush2.bf16.xpose.msra.mxu0 0
    %664 = vmatprep.subr.bf16.mxu0 0
    %665 = vmatpush2.bf16.xpose.msra.mxu0 0
    %666 = vmatprep.subr.bf16.mxu0 0
    %667 = vmatpush2.bf16.xpose.msra.mxu0 0
    %668 = vmatprep.mubr.bf16.mxu0 0
    %669 = vmatmul.mubr.bf16.gmra.mxu0 %v631
    %v670 = vpop.f32.mrf.mxu0
    %v671 = vadd.f32 %v240, %v670
    %v672 = vpop.f32.mrf.mxu0
    %v673 = vpop.f32.mrf.mxu0
    %v674 = vadd.f32 %v241, %v673
    %v675 = vpop.f32.mrf.mxu0
    %676 = vdwg.mxu0
    %v677 = vsel %vm509, %v671, -inf
    %678 = vmax.xlane.f32.xlu0 %v677
    %v679 = vpop.xlane.xlu0 %678
    %v680 = vsel %vm509, %v674, -inf
    %681 = vmax.xlane.f32.xlu0 %v680
    %v682 = vpop.xlane.xlu0 %681
    %v683 = vsub.f32 %v671, %v679
    %v684 = vsub.f32 %v674, %v682
    %v685 = vmul.f32 %v683, 1.442695
    %v686 = vpow.pop %v685
    %v687 = vmul.f32 %v684, 1.442695
    %v688 = vpow.pop %v687
    %v689 = vsel %vm509, %v686, 0.0
    %690 = vadd.xlane.f32.xlu0 %v689
    %v691 = vpop.xlane.xlu0 %690
    %v692 = vsel %vm509, %v688, 0.0
    %693 = vadd.xlane.f32.xlu0 %v692
    %v694 = vpop.xlane.xlu0 %693
    %v695 = vrcp.pop %v691
    %v696 = vrcp.pop %v694
    %v697 = vmul.f32 %v686, %v695
    %v698 = vmul.f32 %v688, %v696
    %v699 = vpack.c.bf16 %v698, %v697
    %701 = vrot.lane.b32.xlu0 %v508, 112
    %v702 = vpop.permute.xlu0 %701
    %v705 = vsel %vm509, %v699, 0
    %707 = vmatprep.subr.bf16.mxu0 0
    %708 = vmatpush1.bf16.msra.mxu0 0
    %709 = vmatprep.subr.bf16.mxu0 0
    %710 = vmatpush1.bf16.msra.mxu0 0
    %711 = vmatprep.subr.bf16.mxu0 0
    %712 = vmatpush1.bf16.msra.mxu0 0
    %713 = vmatprep.subr.bf16.mxu0 0
    %714 = vmatpush1.bf16.msra.mxu0 0
    %715 = vmatprep.subr.bf16.mxu0 0
    %716 = vmatpush1.bf16.msra.mxu0 0
    %717 = vmatprep.subr.bf16.mxu0 0
    %718 = vmatpush1.bf16.msra.mxu0 0
    %719 = vmatprep.subr.bf16.mxu0 0
    %720 = vmatpush1.bf16.msra.mxu0 0
    %721 = vmatprep.subr.bf16.mxu0 0
    %722 = vmatpush1.bf16.msra.mxu0 %v702
    %723 = vmatprep.subr.bf16.mxu0 0
    %724 = vmatpush2.bf16.msra.mxu0 0
    %725 = vmatprep.subr.bf16.mxu0 0
    %726 = vmatpush2.bf16.msra.mxu0 0
    %727 = vmatprep.subr.bf16.mxu0 0
    %728 = vmatpush2.bf16.msra.mxu0 0
    %729 = vmatprep.subr.bf16.mxu0 0
    %730 = vmatpush2.bf16.msra.mxu0 0
    %731 = vmatprep.subr.bf16.mxu0 0
    %732 = vmatpush2.bf16.msra.mxu0 0
    %733 = vmatprep.subr.bf16.mxu0 0
    %734 = vmatpush2.bf16.msra.mxu0 0
    %735 = vmatprep.subr.bf16.mxu0 0
    %736 = vmatpush2.bf16.msra.mxu0 0
    %737 = vmatprep.subr.bf16.mxu0 0
    %738 = vmatpush2.bf16.msra.mxu0 0
    %739 = vmatprep.mubr.bf16.mxu0 0
    %740 = vmatmul.mubr.bf16.gmra.mxu0 %v705
    %v741 = vpop.f32.mrf.mxu0
    %v742 = vadd.f32 0.0, %v741
    %v743 = vpop.f32.mrf.mxu0
    %v744 = vpop.f32.mrf.mxu0
    %v745 = vadd.f32 0.0, %v744
    %v746 = vpop.f32.mrf.mxu0
    %747 = vdwg.mxu0
    %748 = vrot.lane.b32.xlu0 %v506, 96
    %v749 = vpop.permute.xlu0 %748
    %750 = vrot.lane.b32.xlu0 %v507, 96
    %v751 = vpop.permute.xlu0 %750
    %v753 = vsel %vm509, %v749, 0
    %v756 = vsel %vm509, %v751, 0
    %758 = vmatprep.subr.bf16.mxu0 0
    %759 = vmatpush1.bf16.xpose.msra.mxu0 0
    %760 = vmatprep.subr.bf16.mxu0 0
    %761 = vmatpush1.bf16.xpose.msra.mxu0 0
    %762 = vmatprep.subr.bf16.mxu0 0
    %763 = vmatpush1.bf16.xpose.msra.mxu0 0
    %764 = vmatprep.subr.bf16.mxu0 0
    %765 = vmatpush1.bf16.xpose.msra.mxu0 0
    %766 = vmatprep.subr.bf16.mxu0 0
    %767 = vmatpush1.bf16.xpose.msra.mxu0 0
    %768 = vmatprep.subr.bf16.mxu0 0
    %769 = vmatpush1.bf16.xpose.msra.mxu0 0
    %770 = vmatprep.subr.bf16.mxu0 0
    %771 = vmatpush1.bf16.xpose.msra.mxu0 0
    %772 = vmatprep.subr.bf16.mxu0 0
    %773 = vmatpush1.bf16.xpose.msra.mxu0 %v756
    %774 = vmatprep.subr.bf16.mxu0 0
    %775 = vmatpush2.bf16.xpose.msra.mxu0 0
    %776 = vmatprep.subr.bf16.mxu0 0
    %777 = vmatpush2.bf16.xpose.msra.mxu0 0
    %778 = vmatprep.subr.bf16.mxu0 0
    %779 = vmatpush2.bf16.xpose.msra.mxu0 0
    %780 = vmatprep.subr.bf16.mxu0 0
    %781 = vmatpush2.bf16.xpose.msra.mxu0 0
    %782 = vmatprep.subr.bf16.mxu0 0
    %783 = vmatpush2.bf16.xpose.msra.mxu0 0
    %784 = vmatprep.subr.bf16.mxu0 0
    %785 = vmatpush2.bf16.xpose.msra.mxu0 0
    %786 = vmatprep.subr.bf16.mxu0 0
    %787 = vmatpush2.bf16.xpose.msra.mxu0 0
    %788 = vmatprep.subr.bf16.mxu0 0
    %789 = vmatpush2.bf16.xpose.msra.mxu0 0
    %790 = vmatprep.mubr.bf16.mxu0 0
    %791 = vmatmul.mubr.bf16.gmra.mxu0 %v753
    %v792 = vpop.f32.mrf.mxu0
    %v793 = vadd.f32 %v240, %v792
    %v794 = vpop.f32.mrf.mxu0
    %v795 = vpop.f32.mrf.mxu0
    %v796 = vadd.f32 %v241, %v795
    %v797 = vpop.f32.mrf.mxu0
    %798 = vdwg.mxu0
    %v799 = vsel %vm509, %v793, -inf
    %800 = vmax.xlane.f32.xlu0 %v799
    %v801 = vpop.xlane.xlu0 %800
    %v802 = vsel %vm509, %v796, -inf
    %803 = vmax.xlane.f32.xlu0 %v802
    %v804 = vpop.xlane.xlu0 %803
    %v805 = vsub.f32 %v793, %v801
    %v806 = vsub.f32 %v796, %v804
    %v807 = vmul.f32 %v805, 1.442695
    %v808 = vpow.pop %v807
    %v809 = vmul.f32 %v806, 1.442695
    %v810 = vpow.pop %v809
    %v811 = vsel %vm509, %v808, 0.0
    %812 = vadd.xlane.f32.xlu0 %v811
    %v813 = vpop.xlane.xlu0 %812
    %v814 = vsel %vm509, %v810, 0.0
    %815 = vadd.xlane.f32.xlu0 %v814
    %v816 = vpop.xlane.xlu0 %815
    %v817 = vrcp.pop %v813
    %v818 = vrcp.pop %v816
    %v819 = vmul.f32 %v808, %v817
    %v820 = vmul.f32 %v810, %v818
    %v821 = vpack.c.bf16 %v820, %v819
    %822 = vrot.lane.b32.xlu0 %v508, 96
    %v823 = vpop.permute.xlu0 %822
    %v826 = vsel %vm509, %v821, 0
    %828 = vmatprep.subr.bf16.mxu0 0
    %829 = vmatpush1.bf16.msra.mxu0 0
    %830 = vmatprep.subr.bf16.mxu0 0
    %831 = vmatpush1.bf16.msra.mxu0 0
    %832 = vmatprep.subr.bf16.mxu0 0
    %833 = vmatpush1.bf16.msra.mxu0 0
    %834 = vmatprep.subr.bf16.mxu0 0
    %835 = vmatpush1.bf16.msra.mxu0 0
    %836 = vmatprep.subr.bf16.mxu0 0
    %837 = vmatpush1.bf16.msra.mxu0 0
    %838 = vmatprep.subr.bf16.mxu0 0
    %839 = vmatpush1.bf16.msra.mxu0 0
    %840 = vmatprep.subr.bf16.mxu0 0
    %841 = vmatpush1.bf16.msra.mxu0 0
    %842 = vmatprep.subr.bf16.mxu0 0
    %843 = vmatpush1.bf16.msra.mxu0 %v823
    %844 = vmatprep.subr.bf16.mxu0 0
    %845 = vmatpush2.bf16.msra.mxu0 0
    %846 = vmatprep.subr.bf16.mxu0 0
    %847 = vmatpush2.bf16.msra.mxu0 0
    %848 = vmatprep.subr.bf16.mxu0 0
    %849 = vmatpush2.bf16.msra.mxu0 0
    %850 = vmatprep.subr.bf16.mxu0 0
    %851 = vmatpush2.bf16.msra.mxu0 0
    %852 = vmatprep.subr.bf16.mxu0 0
    %853 = vmatpush2.bf16.msra.mxu0 0
    %854 = vmatprep.subr.bf16.mxu0 0
    %855 = vmatpush2.bf16.msra.mxu0 0
    %856 = vmatprep.subr.bf16.mxu0 0
    %857 = vmatpush2.bf16.msra.mxu0 0
    %858 = vmatprep.subr.bf16.mxu0 0
    %859 = vmatpush2.bf16.msra.mxu0 0
    %860 = vmatprep.mubr.bf16.mxu0 0
    %861 = vmatmul.mubr.bf16.gmra.mxu0 %v826
    %v862 = vpop.f32.mrf.mxu0
    %v863 = vadd.f32 0.0, %v862
    %v864 = vpop.f32.mrf.mxu0
    %v865 = vpop.f32.mrf.mxu0
    %v866 = vadd.f32 0.0, %v865
    %v867 = vpop.f32.mrf.mxu0
    %868 = vdwg.mxu0
    %869 = vrot.lane.b32.xlu0 %v506, 80
    %v870 = vpop.permute.xlu0 %869
    %871 = vrot.lane.b32.xlu0 %v507, 80
    %v872 = vpop.permute.xlu0 %871
    %v874 = vsel %vm509, %v870, 0
    %v877 = vsel %vm509, %v872, 0
    %879 = vmatprep.subr.bf16.mxu0 0
    %880 = vmatpush1.bf16.xpose.msra.mxu0 0
    %881 = vmatprep.subr.bf16.mxu0 0
    %882 = vmatpush1.bf16.xpose.msra.mxu0 0
    %883 = vmatprep.subr.bf16.mxu0 0
    %884 = vmatpush1.bf16.xpose.msra.mxu0 0
    %885 = vmatprep.subr.bf16.mxu0 0
    %886 = vmatpush1.bf16.xpose.msra.mxu0 0
    %887 = vmatprep.subr.bf16.mxu0 0
    %888 = vmatpush1.bf16.xpose.msra.mxu0 0
    %889 = vmatprep.subr.bf16.mxu0 0
    %890 = vmatpush1.bf16.xpose.msra.mxu0 0
    %891 = vmatprep.subr.bf16.mxu0 0
    %892 = vmatpush1.bf16.xpose.msra.mxu0 0
    %893 = vmatprep.subr.bf16.mxu0 0
    %894 = vmatpush1.bf16.xpose.msra.mxu0 %v877
    %895 = vmatprep.subr.bf16.mxu0 0
    %896 = vmatpush2.bf16.xpose.msra.mxu0 0
    %897 = vmatprep.subr.bf16.mxu0 0
    %898 = vmatpush2.bf16.xpose.msra.mxu0 0
    %899 = vmatprep.subr.bf16.mxu0 0
    %900 = vmatpush2.bf16.xpose.msra.mxu0 0
    %901 = vmatprep.subr.bf16.mxu0 0
    %902 = vmatpush2.bf16.xpose.msra.mxu0 0
    %903 = vmatprep.subr.bf16.mxu0 0
    %904 = vmatpush2.bf16.xpose.msra.mxu0 0
    %905 = vmatprep.subr.bf16.mxu0 0
    %906 = vmatpush2.bf16.xpose.msra.mxu0 0
    %907 = vmatprep.subr.bf16.mxu0 0
    %908 = vmatpush2.bf16.xpose.msra.mxu0 0
    %909 = vmatprep.subr.bf16.mxu0 0
    %910 = vmatpush2.bf16.xpose.msra.mxu0 0
    %911 = vmatprep.mubr.bf16.mxu0 0
    %912 = vmatmul.mubr.bf16.gmra.mxu0 %v874
    %v913 = vpop.f32.mrf.mxu0
    %v914 = vadd.f32 %v240, %v913
    %v915 = vpop.f32.mrf.mxu0
    %v916 = vpop.f32.mrf.mxu0
    %v917 = vadd.f32 %v241, %v916
    %v918 = vpop.f32.mrf.mxu0
    %919 = vdwg.mxu0
    %v920 = vsel %vm509, %v914, -inf
    %921 = vmax.xlane.f32.xlu0 %v920
    %v922 = vpop.xlane.xlu0 %921
    %v923 = vsel %vm509, %v917, -inf
    %924 = vmax.xlane.f32.xlu0 %v923
    %v925 = vpop.xlane.xlu0 %924
    %v926 = vsub.f32 %v914, %v922
    %v927 = vsub.f32 %v917, %v925
    %v928 = vmul.f32 %v926, 1.442695
    %v929 = vpow.pop %v928
    %v930 = vmul.f32 %v927, 1.442695
    %v931 = vpow.pop %v930
    %v932 = vsel %vm509, %v929, 0.0
    %933 = vadd.xlane.f32.xlu0 %v932
    %v934 = vpop.xlane.xlu0 %933
    %v935 = vsel %vm509, %v931, 0.0
    %936 = vadd.xlane.f32.xlu0 %v935
    %v937 = vpop.xlane.xlu0 %936
    %v938 = vrcp.pop %v934
    %v939 = vrcp.pop %v937
    %v940 = vmul.f32 %v929, %v938
    %v941 = vmul.f32 %v931, %v939
    %v942 = vpack.c.bf16 %v941, %v940
    %943 = vrot.lane.b32.xlu0 %v508, 80
    %v944 = vpop.permute.xlu0 %943
    %v947 = vsel %vm509, %v942, 0
    %949 = vmatprep.subr.bf16.mxu0 0
    %950 = vmatpush1.bf16.msra.mxu0 0
    %951 = vmatprep.subr.bf16.mxu0 0
    %952 = vmatpush1.bf16.msra.mxu0 0
    %953 = vmatprep.subr.bf16.mxu0 0
    %954 = vmatpush1.bf16.msra.mxu0 0
    %955 = vmatprep.subr.bf16.mxu0 0
    %956 = vmatpush1.bf16.msra.mxu0 0
    %957 = vmatprep.subr.bf16.mxu0 0
    %958 = vmatpush1.bf16.msra.mxu0 0
    %959 = vmatprep.subr.bf16.mxu0 0
    %960 = vmatpush1.bf16.msra.mxu0 0
    %961 = vmatprep.subr.bf16.mxu0 0
    %962 = vmatpush1.bf16.msra.mxu0 0
    %963 = vmatprep.subr.bf16.mxu0 0
    %964 = vmatpush1.bf16.msra.mxu0 %v944
    %965 = vmatprep.subr.bf16.mxu0 0
    %966 = vmatpush2.bf16.msra.mxu0 0
    %967 = vmatprep.subr.bf16.mxu0 0
    %968 = vmatpush2.bf16.msra.mxu0 0
    %969 = vmatprep.subr.bf16.mxu0 0
    %970 = vmatpush2.bf16.msra.mxu0 0
    %971 = vmatprep.subr.bf16.mxu0 0
    %972 = vmatpush2.bf16.msra.mxu0 0
    %973 = vmatprep.subr.bf16.mxu0 0
    %974 = vmatpush2.bf16.msra.mxu0 0
    %975 = vmatprep.subr.bf16.mxu0 0
    %976 = vmatpush2.bf16.msra.mxu0 0
    %977 = vmatprep.subr.bf16.mxu0 0
    %978 = vmatpush2.bf16.msra.mxu0 0
    %979 = vmatprep.subr.bf16.mxu0 0
    %980 = vmatpush2.bf16.msra.mxu0 0
    %981 = vmatprep.mubr.bf16.mxu0 0
    %982 = vmatmul.mubr.bf16.gmra.mxu0 %v947
    %v983 = vpop.f32.mrf.mxu0
    %v984 = vadd.f32 0.0, %v983
    %v985 = vpop.f32.mrf.mxu0
    %v986 = vpop.f32.mrf.mxu0
    %v987 = vadd.f32 0.0, %v986
    %v988 = vpop.f32.mrf.mxu0
    %989 = vdwg.mxu0
    %992 = vrot.lane.b32.xlu0 %v742, 16
    %v993 = vpop.permute.xlu0 %992
    %994 = vrot.lane.b32.xlu0 %v745, 16
    %v995 = vpop.permute.xlu0 %994
    %1000 = vrot.lane.b32.xlu0 %v863, 32
    %v1001 = vpop.permute.xlu0 %1000
    %1002 = vrot.lane.b32.xlu0 %v866, 32
    %v1003 = vpop.permute.xlu0 %1002
    %1008 = vrot.lane.b32.xlu0 %v984, 48
    %v1009 = vpop.permute.xlu0 %1008
    %1010 = vrot.lane.b32.xlu0 %v987, 48
    %v1011 = vpop.permute.xlu0 %1010
    %v1014 = vsel %vm509, %v618, %v993
    %v1015 = vsel %vm509, %v621, %v995
    %vm1016 = vcmask 261120
    %v1017 = vsel %vm1016, %v1014, %v1001
    %v1018 = vsel %vm1016, %v1015, %v1003
    %vm1019 = vcmask 392192
    %v1020 = vsel %vm1019, %v1017, %v1009
    %v1021 = vsel %vm1019, %v1018, %v1011
    %v1022 = vpack.c.bf16 %v1021, %v1020
    %v1031 = vunpack.c.l.b16 %v259
    %v1032 = vunpack.c.l.b16 %v260
    %v1033 = vunpack.c.l.b16 %v261
    %v1034 = vunpack.c.l.b16 %v262
    %v1035 = vunpack.c.l.b16 %v263
    %v1036 = vunpack.c.l.b16 %v264
    %v1037 = vunpack.c.l.b16 %v265
    %v1038 = vunpack.c.l.b16 %v266
    %v1039 = vpack.c.b16 %v1032, %v1031
    %v1040 = vpack.c.b16 %v1034, %v1033
    %v1041 = vpack.c.b16 %v1036, %v1035
    %v1042 = vpack.c.b16 %v1038, %v1037
    %v1048 = vsel %vm294, %v1022, 0
    %1050 = vmatprep.subr.bf16.mxu0 0
    %1051 = vmatpush1.bf16.msra.mxu0 0
    %1052 = vmatprep.subr.bf16.mxu0 0
    %1053 = vmatpush1.bf16.msra.mxu0 0
    %1054 = vmatprep.subr.bf16.mxu0 0
    %1055 = vmatpush1.bf16.msra.mxu0 0
    %1056 = vmatprep.subr.bf16.mxu0 0
    %1057 = vmatpush1.bf16.msra.mxu0 0
    %1058 = vmatprep.subr.bf16.mxu0 0
    %1059 = vmatpush1.bf16.msra.mxu0 %v1042
    %1060 = vmatprep.subr.bf16.mxu0 0
    %1061 = vmatpush1.bf16.msra.mxu0 %v1041
    %1062 = vmatprep.subr.bf16.mxu0 0
    %1063 = vmatpush1.bf16.msra.mxu0 %v1040
    %1064 = vmatprep.subr.bf16.mxu0 0
    %1065 = vmatpush1.bf16.msra.mxu0 %v1039
    %1066 = vmatprep.subr.bf16.mxu0 0
    %1067 = vmatpush2.bf16.msra.mxu0 0
    %1068 = vmatprep.subr.bf16.mxu0 0
    %1069 = vmatpush2.bf16.msra.mxu0 0
    %1070 = vmatprep.subr.bf16.mxu0 0
    %1071 = vmatpush2.bf16.msra.mxu0 0
    %1072 = vmatprep.subr.bf16.mxu0 0
    %1073 = vmatpush2.bf16.msra.mxu0 0
    %1074 = vmatprep.subr.bf16.mxu0 0
    %1075 = vmatpush2.bf16.msra.mxu0 0
    %1076 = vmatprep.subr.bf16.mxu0 0
    %1077 = vmatpush2.bf16.msra.mxu0 0
    %1078 = vmatprep.subr.bf16.mxu0 0
    %1079 = vmatpush2.bf16.msra.mxu0 0
    %1080 = vmatprep.subr.bf16.mxu0 0
    %1081 = vmatpush2.bf16.msra.mxu0 0
    %1082 = vmatprep.mubr.bf16.mxu0 0
    %1083 = vmatmul.mubr.bf16.gmra.mxu0 %v1048
    %v1084 = vpop.f32.mrf.mxu0
    %v1085 = vadd.f32 0.0, %v1084
    %v1086 = vpop.f32.mrf.mxu0
    %v1087 = vpop.f32.mrf.mxu0
    %v1088 = vadd.f32 0.0, %v1087
    %v1089 = vpop.f32.mrf.mxu0
    %1090 = vdwg.mxu0
    %v1091 = vadd.f32 %v230, %v1085
    %v1092 = vadd.f32 %v233, %v1088
    %v1093 = vmul.f32 %v1091, %v1091
    %v1094 = vmul.f32 %v1092, %v1092
    %v1095 = vsel %vm294, %v1093, 0.0
    %1096 = vadd.xlane.f32.xlu0 %v1095
    %v1097 = vpop.xlane.xlu0 %1096
    %v1098 = vsel %vm294, %v1094, 0.0
    %1099 = vadd.xlane.f32.xlu0 %v1098
    %v1100 = vpop.xlane.xlu0 %1099
    %v1101 = vmul.f32 %v1097, %v301
    %v1102 = vmul.f32 %v1100, %v301
    %v1103 = vadd.f32 %v1101, 1e-05
    %v1104 = vadd.f32 %v1102, 1e-05
    %v1105 = vrsqrt.pop %v1103
    %v1106 = vrsqrt.pop %v1104
    %v1107 = vmul.f32 %v1091, %v1105
    %v1108 = vmul.f32 %v1092, %v1106
    %v1110 = vlaneseq
    %v1111 = vshrl.u32 %v1110, 7
    %v1112 = vsub.s32 0, %v1111
    %v1113 = vrot.slane %v267, %v1112
    %v1115 = vmul.f32 %v1107, %v1113
    %v1116 = vmul.f32 %v1108, %v1113
    %v1117 = vpack.c.bf16 %v1116, %v1115
    %v1126 = vunpack.c.l.b16 %v268
    %v1127 = vunpack.c.h.b16 %v268
    %v1128 = vunpack.c.l.b16 %v269
    %v1129 = vunpack.c.h.b16 %v269
    %v1130 = vunpack.c.l.b16 %v270
    %v1131 = vunpack.c.h.b16 %v270
    %v1132 = vunpack.c.l.b16 %v271
    %v1133 = vunpack.c.h.b16 %v271
    %v1134 = vunpack.c.l.b16 %v272
    %v1135 = vunpack.c.h.b16 %v272
    %v1136 = vunpack.c.l.b16 %v273
    %v1137 = vunpack.c.h.b16 %v273
    %v1138 = vunpack.c.l.b16 %v274
    %v1139 = vunpack.c.h.b16 %v274
    %v1140 = vunpack.c.l.b16 %v275
    %v1141 = vunpack.c.h.b16 %v275
    %v1142 = vpack.c.b16 %v1128, %v1126
    %v1143 = vpack.c.b16 %v1129, %v1127
    %v1144 = vpack.c.b16 %v1132, %v1130
    %v1145 = vpack.c.b16 %v1133, %v1131
    %v1146 = vpack.c.b16 %v1136, %v1134
    %v1147 = vpack.c.b16 %v1137, %v1135
    %v1148 = vpack.c.b16 %v1140, %v1138
    %v1149 = vpack.c.b16 %v1141, %v1139
    %v1159 = vsel %vm294, %v1117, 0
    %1161 = vmatprep.subr.bf16.mxu0 0
    %1162 = vmatpush1.bf16.msra.mxu0 0
    %1163 = vmatprep.subr.bf16.mxu0 0
    %1164 = vmatpush1.bf16.msra.mxu0 0
    %1165 = vmatprep.subr.bf16.mxu0 0
    %1166 = vmatpush1.bf16.msra.mxu0 0
    %1167 = vmatprep.subr.bf16.mxu0 0
    %1168 = vmatpush1.bf16.msra.mxu0 0
    %1169 = vmatprep.subr.bf16.mxu0 %v1149
    %1170 = vmatpush1.bf16.msra.mxu0 %v1148
    %1171 = vmatprep.subr.bf16.mxu0 %v1147
    %1172 = vmatpush1.bf16.msra.mxu0 %v1146
    %1173 = vmatprep.subr.bf16.mxu0 %v1145
    %1174 = vmatpush1.bf16.msra.mxu0 %v1144
    %1175 = vmatprep.subr.bf16.mxu0 %v1143
    %1176 = vmatpush1.bf16.msra.mxu0 %v1142
    %1177 = vmatprep.subr.bf16.mxu0 0
    %1178 = vmatpush2.bf16.msra.mxu0 0
    %1179 = vmatprep.subr.bf16.mxu0 0
    %1180 = vmatpush2.bf16.msra.mxu0 0
    %1181 = vmatprep.subr.bf16.mxu0 0
    %1182 = vmatpush2.bf16.msra.mxu0 0
    %1183 = vmatprep.subr.bf16.mxu0 0
    %1184 = vmatpush2.bf16.msra.mxu0 0
    %1185 = vmatprep.subr.bf16.mxu0 0
    %1186 = vmatpush2.bf16.msra.mxu0 0
    %1187 = vmatprep.subr.bf16.mxu0 0
    %1188 = vmatpush2.bf16.msra.mxu0 0
    %1189 = vmatprep.subr.bf16.mxu0 0
    %1190 = vmatpush2.bf16.msra.mxu0 0
    %1191 = vmatprep.subr.bf16.mxu0 0
    %1192 = vmatpush2.bf16.msra.mxu0 0
    %1193 = vmatprep.mubr.bf16.mxu0 0
    %1194 = vmatmul.mubr.bf16.gmra.mxu0 %v1159
    %v1195 = vpop.f32.mrf.mxu0
    %v1196 = vadd.f32 0.0, %v1195
    %v1197 = vpop.f32.mrf.mxu0
    %v1198 = vadd.f32 0.0, %v1197
    %v1199 = vpop.f32.mrf.mxu0
    %v1200 = vadd.f32 0.0, %v1199
    %v1201 = vpop.f32.mrf.mxu0
    %v1202 = vadd.f32 0.0, %v1201
    %1203 = vdwg.mxu0
    %v1204 = vsub.f32 0.0, %v1196
    %v1205 = vsub.f32 0.0, %v1200
    %v1206 = vmul.f32 %v1204, 1.442695
    %v1207 = vpow.pop %v1206
    %v1208 = vmul.f32 %v1205, 1.442695
    %v1209 = vpow.pop %v1208
    %v1210 = vadd.f32 %v1207, 1.0
    %v1211 = vadd.f32 %v1209, 1.0
    %v1212 = vrcp.pop %v1210
    %v1213 = vrcp.pop %v1211
    %v1214 = vmul.f32 %v1196, %v1212
    %v1215 = vmul.f32 %v1200, %v1213
    %v1216 = vmul.f32 %v1214, %v1198
    %v1217 = vmul.f32 %v1215, %v1202
    %v1218 = vpack.c.bf16 %v1217, %v1216
    %v1235 = vunpack.c.l.b16 %v276
    %v1236 = vunpack.c.l.b16 %v277
    %v1237 = vunpack.c.l.b16 %v278
    %v1238 = vunpack.c.l.b16 %v279
    %v1239 = vunpack.c.l.b16 %v280
    %v1240 = vunpack.c.l.b16 %v281
    %v1241 = vunpack.c.l.b16 %v282
    %v1242 = vunpack.c.l.b16 %v283
    %v1243 = vunpack.c.l.b16 %v284
    %v1244 = vunpack.c.l.b16 %v285
    %v1245 = vunpack.c.l.b16 %v286
    %v1246 = vunpack.c.l.b16 %v287
    %v1247 = vunpack.c.l.b16 %v288
    %v1248 = vunpack.c.l.b16 %v289
    %v1249 = vunpack.c.l.b16 %v290
    %v1250 = vunpack.c.l.b16 %v291
    %v1251 = vpack.c.b16 %v1236, %v1235
    %v1252 = vpack.c.b16 %v1238, %v1237
    %v1253 = vpack.c.b16 %v1240, %v1239
    %v1254 = vpack.c.b16 %v1242, %v1241
    %v1255 = vpack.c.b16 %v1244, %v1243
    %v1256 = vpack.c.b16 %v1246, %v1245
    %v1257 = vpack.c.b16 %v1248, %v1247
    %v1258 = vpack.c.b16 %v1250, %v1249
    %1267 = vmatprep.subr.bf16.mxu0 0
    %1268 = vmatpush1.bf16.msra.mxu0 %v1258
    %1269 = vmatprep.subr.bf16.mxu0 0
    %1270 = vmatpush1.bf16.msra.mxu0 %v1257
    %1271 = vmatprep.subr.bf16.mxu0 0
    %1272 = vmatpush1.bf16.msra.mxu0 %v1256
    %1273 = vmatprep.subr.bf16.mxu0 0
    %1274 = vmatpush1.bf16.msra.mxu0 %v1255
    %1275 = vmatprep.subr.bf16.mxu0 0
    %1276 = vmatpush1.bf16.msra.mxu0 %v1254
    %1277 = vmatprep.subr.bf16.mxu0 0
    %1278 = vmatpush1.bf16.msra.mxu0 %v1253
    %1279 = vmatprep.subr.bf16.mxu0 0
    %1280 = vmatpush1.bf16.msra.mxu0 %v1252
    %1281 = vmatprep.subr.bf16.mxu0 0
    %1282 = vmatpush1.bf16.msra.mxu0 %v1251
    %1283 = vmatprep.subr.bf16.mxu0 0
    %1284 = vmatpush2.bf16.msra.mxu0 0
    %1285 = vmatprep.subr.bf16.mxu0 0
    %1286 = vmatpush2.bf16.msra.mxu0 0
    %1287 = vmatprep.subr.bf16.mxu0 0
    %1288 = vmatpush2.bf16.msra.mxu0 0
    %1289 = vmatprep.subr.bf16.mxu0 0
    %1290 = vmatpush2.bf16.msra.mxu0 0
    %1291 = vmatprep.subr.bf16.mxu0 0
    %1292 = vmatpush2.bf16.msra.mxu0 0
    %1293 = vmatprep.subr.bf16.mxu0 0
    %1294 = vmatpush2.bf16.msra.mxu0 0
    %1295 = vmatprep.subr.bf16.mxu0 0
    %1296 = vmatpush2.bf16.msra.mxu0 0
    %1297 = vmatprep.subr.bf16.mxu0 0
    %1298 = vmatpush2.bf16.msra.mxu0 0
    %1299 = vmatprep.mubr.bf16.mxu0 0
    %1300 = vmatmul.mubr.bf16.gmra.mxu0 %v1218
    %v1301 = vpop.f32.mrf.mxu0
    %v1302 = vadd.f32 0.0, %v1301
    %v1303 = vpop.f32.mrf.mxu0
    %v1304 = vpop.f32.mrf.mxu0
    %v1305 = vadd.f32 0.0, %v1304
    %v1306 = vpop.f32.mrf.mxu0
    %1307 = vdwg.mxu0
    %v1308 = vadd.f32 %v1091, %v1302
    %v1309 = vadd.f32 %v1092, %v1305
    %s1310 = scalar_lea.vmem %s2, 1
    %v1311 = vld [vmem:[%s1310] sm:$0x1]
    %s1312 = scalar_lea.vmem %s3, 96
    %v1313 = vld [vmem:[%s1312] sm:$0xff]
    %v1314 = vld [vmem:[%s1312 + $0x8] sm:$0xf]
    %v1315 = vld [vmem:[%s1312 + $0xc] sm:$0xff]
    %v1316 = vld [vmem:[%s1312 + $0x14] sm:$0xf]
    %v1317 = vld [vmem:[%s1312 + $0x18] sm:$0xff]
    %v1318 = vld [vmem:[%s1312 + $0x20] sm:$0xf]
    %v1319 = vld [vmem:[%s1312 + $0x24] sm:$0xff]
    %v1320 = vld [vmem:[%s1312 + $0x2c] sm:$0xf]
    %v1321 = vld [vmem:[%s1312 + $0x30] sm:$0xff]
    %v1322 = vld [vmem:[%s1312 + $0x38] sm:$0xf]
    %v1323 = vld [vmem:[%s1312 + $0x3c] sm:$0xff]
    %v1324 = vld [vmem:[%s1312 + $0x44] sm:$0xf]
    %v1325 = vld [vmem:[%s1312 + $0x48] sm:$0xff]
    %v1326 = vld [vmem:[%s1312 + $0x50] sm:$0xf]
    %v1327 = vld [vmem:[%s1312 + $0x54] sm:$0xff]
    %v1328 = vld [vmem:[%s1312 + $0x5c] sm:$0xf]
    %s1329 = scalar_lea.vmem [#allocation2], 32
    %v1330 = vld [vmem:[%s1329] sm:$0xf]
    %v1331 = vld [vmem:[%s1329 + $0x4] sm:$0xf]
    %v1332 = vld [vmem:[%s1329 + $0x8] sm:$0xf]
    %v1333 = vld [vmem:[%s1329 + $0xc] sm:$0xf]
    %v1334 = vld [vmem:[%s1329 + $0x10] sm:$0xf]
    %v1335 = vld [vmem:[%s1329 + $0x14] sm:$0xf]
    %v1336 = vld [vmem:[%s1329 + $0x18] sm:$0xf]
    %v1337 = vld [vmem:[%s1329 + $0x1c] sm:$0xf]
    %s1338 = scalar_lea.vmem %s5, 1
    %v1339 = vld [vmem:[%s1338] sm:$0x1]
    %s1340 = scalar_lea.vmem %s6, 64
    %v1341 = vld [vmem:[%s1340] sm:$0xff]
    %v1342 = vld [vmem:[%s1340 + $0x8] sm:$0xff]
    %v1343 = vld [vmem:[%s1340 + $0x10] sm:$0xff]
    %v1344 = vld [vmem:[%s1340 + $0x18] sm:$0xff]
    %v1345 = vld [vmem:[%s1340 + $0x20] sm:$0xff]
    %v1346 = vld [vmem:[%s1340 + $0x28] sm:$0xff]
    %v1347 = vld [vmem:[%s1340 + $0x30] sm:$0xff]
    %v1348 = vld [vmem:[%s1340 + $0x38] sm:$0xff]
    %s1349 = scalar_lea.vmem %s7, 64
    %v1350 = vld [vmem:[%s1349] sm:$0xf]
    %v1351 = vld [vmem:[%s1349 + $0x4] sm:$0xf]
    %v1352 = vld [vmem:[%s1349 + $0x8] sm:$0xf]
    %v1353 = vld [vmem:[%s1349 + $0xc] sm:$0xf]
    %v1354 = vld [vmem:[%s1349 + $0x10] sm:$0xf]
    %v1355 = vld [vmem:[%s1349 + $0x14] sm:$0xf]
    %v1356 = vld [vmem:[%s1349 + $0x18] sm:$0xf]
    %v1357 = vld [vmem:[%s1349 + $0x1c] sm:$0xf]
    %v1358 = vld [vmem:[%s1349 + $0x20] sm:$0xf]
    %v1359 = vld [vmem:[%s1349 + $0x24] sm:$0xf]
    %v1360 = vld [vmem:[%s1349 + $0x28] sm:$0xf]
    %v1361 = vld [vmem:[%s1349 + $0x2c] sm:$0xf]
    %v1362 = vld [vmem:[%s1349 + $0x30] sm:$0xf]
    %v1363 = vld [vmem:[%s1349 + $0x34] sm:$0xf]
    %v1364 = vld [vmem:[%s1349 + $0x38] sm:$0xf]
    %v1365 = vld [vmem:[%s1349 + $0x3c] sm:$0xf]
    %v1366 = vmul.f32 %v1308, %v1308
    %v1367 = vmul.f32 %v1309, %v1309
    %v1368 = vsel %vm294, %v1366, 0.0
    %1369 = vadd.xlane.f32.xlu0 %v1368
    %v1370 = vpop.xlane.xlu0 %1369
    %v1371 = vsel %vm294, %v1367, 0.0
    %1372 = vadd.xlane.f32.xlu0 %v1371
    %v1373 = vpop.xlane.xlu0 %1372
    %v1374 = vmul.f32 %v1370, %v301
    %v1375 = vmul.f32 %v1373, %v301
    %v1376 = vadd.f32 %v1374, 1e-05
    %v1377 = vadd.f32 %v1375, 1e-05
    %v1378 = vrsqrt.pop %v1376
    %v1379 = vrsqrt.pop %v1377
    %v1380 = vmul.f32 %v1308, %v1378
    %v1381 = vmul.f32 %v1309, %v1379
    %v1383 = vlaneseq
    %v1384 = vshrl.u32 %v1383, 7
    %v1385 = vsub.s32 0, %v1384
    %v1386 = vrot.slane %v1311, %v1385
    %v1388 = vmul.f32 %v1380, %v1386
    %v1389 = vmul.f32 %v1381, %v1386
    %v1390 = vpack.c.bf16 %v1389, %v1388
    %v1407 = vunpack.c.l.b16 %v1313
    %v1408 = vunpack.c.h.b16 %v1313
    %v1409 = vunpack.c.l.b16 %v1314
    %v1410 = vunpack.c.l.b16 %v1315
    %v1411 = vunpack.c.h.b16 %v1315
    %v1412 = vunpack.c.l.b16 %v1316
    %v1413 = vunpack.c.l.b16 %v1317
    %v1414 = vunpack.c.h.b16 %v1317
    %v1415 = vunpack.c.l.b16 %v1318
    %v1416 = vunpack.c.l.b16 %v1319
    %v1417 = vunpack.c.h.b16 %v1319
    %v1418 = vunpack.c.l.b16 %v1320
    %v1419 = vunpack.c.l.b16 %v1321
    %v1420 = vunpack.c.h.b16 %v1321
    %v1421 = vunpack.c.l.b16 %v1322
    %v1422 = vunpack.c.l.b16 %v1323
    %v1423 = vunpack.c.h.b16 %v1323
    %v1424 = vunpack.c.l.b16 %v1324
    %v1425 = vunpack.c.l.b16 %v1325
    %v1426 = vunpack.c.h.b16 %v1325
    %v1427 = vunpack.c.l.b16 %v1326
    %v1428 = vunpack.c.l.b16 %v1327
    %v1429 = vunpack.c.h.b16 %v1327
    %v1430 = vunpack.c.l.b16 %v1328
    %v1431 = vpack.c.b16 %v1410, %v1407
    %v1432 = vpack.c.b16 %v1411, %v1408
    %v1433 = vpack.c.b16 %v1412, %v1409
    %v1434 = vpack.c.b16 %v1416, %v1413
    %v1435 = vpack.c.b16 %v1417, %v1414
    %v1436 = vpack.c.b16 %v1418, %v1415
    %v1437 = vpack.c.b16 %v1422, %v1419
    %v1438 = vpack.c.b16 %v1423, %v1420
    %v1439 = vpack.c.b16 %v1424, %v1421
    %v1440 = vpack.c.b16 %v1428, %v1425
    %v1441 = vpack.c.b16 %v1429, %v1426
    %v1442 = vpack.c.b16 %v1430, %v1427
    %v1456 = vsel %vm294, %v1390, 0
    %1458 = vmatprep.subr.bf16.mxu0 0
    %1459 = vmatpush1.bf16.msra.mxu0 0
    %1460 = vmatprep.subr.bf16.mxu0 0
    %1461 = vmatpush1.bf16.msra.mxu0 0
    %1462 = vmatprep.subr.bf16.mxu0 0
    %1463 = vmatpush1.bf16.msra.mxu0 0
    %1464 = vmatprep.subr.bf16.mxu0 0
    %1465 = vmatpush1.bf16.msra.mxu0 0
    %1466 = vmatprep.subr.bf16.mxu0 %v1441
    %1467 = vmatpush1.bf16.msra.mxu0 %v1440
    %1468 = vmatprep.subr.bf16.mxu0 %v1438
    %1469 = vmatpush1.bf16.msra.mxu0 %v1437
    %1470 = vmatprep.subr.bf16.mxu0 %v1435
    %1471 = vmatpush1.bf16.msra.mxu0 %v1434
    %1472 = vmatprep.subr.bf16.mxu0 %v1432
    %1473 = vmatpush1.bf16.msra.mxu0 %v1431
    %1474 = vmatprep.subr.bf16.mxu0 0
    %1475 = vmatpush2.bf16.msra.mxu0 0
    %1476 = vmatprep.subr.bf16.mxu0 0
    %1477 = vmatpush2.bf16.msra.mxu0 0
    %1478 = vmatprep.subr.bf16.mxu0 0
    %1479 = vmatpush2.bf16.msra.mxu0 0
    %1480 = vmatprep.subr.bf16.mxu0 0
    %1481 = vmatpush2.bf16.msra.mxu0 0
    %1482 = vmatprep.subr.bf16.mxu0 0
    %1483 = vmatpush2.bf16.msra.mxu0 0
    %1484 = vmatprep.subr.bf16.mxu0 0
    %1485 = vmatpush2.bf16.msra.mxu0 0
    %1486 = vmatprep.subr.bf16.mxu0 0
    %1487 = vmatpush2.bf16.msra.mxu0 0
    %1488 = vmatprep.subr.bf16.mxu0 0
    %1489 = vmatpush2.bf16.msra.mxu0 0
    %1490 = vmatprep.mubr.bf16.mxu0 0
    %1491 = vmatmul.mubr.bf16.gmra.mxu0 %v1456
    %v1492 = vpop.f32.mrf.mxu0
    %v1493 = vadd.f32 0.0, %v1492
    %v1494 = vpop.f32.mrf.mxu0
    %v1495 = vadd.f32 0.0, %v1494
    %v1496 = vpop.f32.mrf.mxu0
    %v1497 = vadd.f32 0.0, %v1496
    %v1498 = vpop.f32.mrf.mxu0
    %v1499 = vadd.f32 0.0, %v1498
    %1500 = vdwg.mxu0
    %1501 = vmatprep.subr.bf16.mxu0 0
    %1502 = vmatpush1.bf16.msra.mxu0 0
    %1503 = vmatprep.subr.bf16.mxu0 0
    %1504 = vmatpush1.bf16.msra.mxu0 0
    %1505 = vmatprep.subr.bf16.mxu0 0
    %1506 = vmatpush1.bf16.msra.mxu0 0
    %1507 = vmatprep.subr.bf16.mxu0 0
    %1508 = vmatpush1.bf16.msra.mxu0 0
    %1509 = vmatprep.subr.bf16.mxu0 0
    %1510 = vmatpush1.bf16.msra.mxu0 %v1442
    %1511 = vmatprep.subr.bf16.mxu0 0
    %1512 = vmatpush1.bf16.msra.mxu0 %v1439
    %1513 = vmatprep.subr.bf16.mxu0 0
    %1514 = vmatpush1.bf16.msra.mxu0 %v1436
    %1515 = vmatprep.subr.bf16.mxu0 0
    %1516 = vmatpush1.bf16.msra.mxu0 %v1433
    %1517 = vmatprep.subr.bf16.mxu0 0
    %1518 = vmatpush2.bf16.msra.mxu0 0
    %1519 = vmatprep.subr.bf16.mxu0 0
    %1520 = vmatpush2.bf16.msra.mxu0 0
    %1521 = vmatprep.subr.bf16.mxu0 0
    %1522 = vmatpush2.bf16.msra.mxu0 0
    %1523 = vmatprep.subr.bf16.mxu0 0
    %1524 = vmatpush2.bf16.msra.mxu0 0
    %1525 = vmatprep.subr.bf16.mxu0 0
    %1526 = vmatpush2.bf16.msra.mxu0 0
    %1527 = vmatprep.subr.bf16.mxu0 0
    %1528 = vmatpush2.bf16.msra.mxu0 0
    %1529 = vmatprep.subr.bf16.mxu0 0
    %1530 = vmatpush2.bf16.msra.mxu0 0
    %1531 = vmatprep.subr.bf16.mxu0 0
    %1532 = vmatpush2.bf16.msra.mxu0 0
    %1533 = vmatprep.mubr.bf16.mxu0 0
    %1534 = vmatmul.mubr.bf16.gmra.mxu0 %v1456
    %v1535 = vpop.f32.mrf.mxu0
    %v1536 = vadd.f32 0.0, %v1535
    %v1537 = vpop.f32.mrf.mxu0
    %v1538 = vpop.f32.mrf.mxu0
    %v1539 = vadd.f32 0.0, %v1538
    %v1540 = vpop.f32.mrf.mxu0
    %1541 = vdwg.mxu0
    %v1542 = vmul.f32 %v1493, %v236
    %v1543 = vmul.f32 %v1497, %v237
    %v1544 = vmul.f32 %v1493, %v475
    %v1545 = vmul.f32 %v1497, %v477
    %1548 = vrot.lane.b32.xlu0 %v1544, 64
    %v1549 = vpop.permute.xlu0 %1548
    %1550 = vrot.lane.b32.xlu0 %v1545, 64
    %v1551 = vpop.permute.xlu0 %1550
    %v1554 = vadd.f32 %v1542, %v1549
    %v1555 = vadd.f32 %v1543, %v1551
    %v1556 = vmul.f32 %v1495, %v236
    %v1557 = vmul.f32 %v1499, %v237
    %v1558 = vmul.f32 %v1495, %v475
    %v1559 = vmul.f32 %v1499, %v477
    %1562 = vrot.lane.b32.xlu0 %v1558, 64
    %v1563 = vpop.permute.xlu0 %1562
    %1564 = vrot.lane.b32.xlu0 %v1559, 64
    %v1565 = vpop.permute.xlu0 %1564
    %v1568 = vadd.f32 %v1556, %v1563
    %v1569 = vadd.f32 %v1557, %v1565
    %v1570 = vpack.c.bf16 %v1555, %v1554
    %v1571 = vpack.c.bf16 %v1569, %v1568
    %v1572 = vpack.c.bf16 %v1539, %v1536
    %v1574 = vsel %vm509, %v1570, 0
    %v1577 = vsel %vm509, %v1571, 0
    %1579 = vmatprep.subr.bf16.mxu0 0
    %1580 = vmatpush1.bf16.xpose.msra.mxu0 0
    %1581 = vmatprep.subr.bf16.mxu0 0
    %1582 = vmatpush1.bf16.xpose.msra.mxu0 0
    %1583 = vmatprep.subr.bf16.mxu0 0
    %1584 = vmatpush1.bf16.xpose.msra.mxu0 0
    %1585 = vmatprep.subr.bf16.mxu0 0
    %1586 = vmatpush1.bf16.xpose.msra.mxu0 0
    %1587 = vmatprep.subr.bf16.mxu0 0
    %1588 = vmatpush1.bf16.xpose.msra.mxu0 0
    %1589 = vmatprep.subr.bf16.mxu0 0
    %1590 = vmatpush1.bf16.xpose.msra.mxu0 0
    %1591 = vmatprep.subr.bf16.mxu0 0
    %1592 = vmatpush1.bf16.xpose.msra.mxu0 0
    %1593 = vmatprep.subr.bf16.mxu0 0
    %1594 = vmatpush1.bf16.xpose.msra.mxu0 %v1577
    %1595 = vmatprep.subr.bf16.mxu0 0
    %1596 = vmatpush2.bf16.xpose.msra.mxu0 0
    %1597 = vmatprep.subr.bf16.mxu0 0
    %1598 = vmatpush2.bf16.xpose.msra.mxu0 0
    %1599 = vmatprep.subr.bf16.mxu0 0
    %1600 = vmatpush2.bf16.xpose.msra.mxu0 0
    %1601 = vmatprep.subr.bf16.mxu0 0
    %1602 = vmatpush2.bf16.xpose.msra.mxu0 0
    %1603 = vmatprep.subr.bf16.mxu0 0
    %1604 = vmatpush2.bf16.xpose.msra.mxu0 0
    %1605 = vmatprep.subr.bf16.mxu0 0
    %1606 = vmatpush2.bf16.xpose.msra.mxu0 0
    %1607 = vmatprep.subr.bf16.mxu0 0
    %1608 = vmatpush2.bf16.xpose.msra.mxu0 0
    %1609 = vmatprep.subr.bf16.mxu0 0
    %1610 = vmatpush2.bf16.xpose.msra.mxu0 0
    %1611 = vmatprep.mubr.bf16.mxu0 0
    %1612 = vmatmul.mubr.bf16.gmra.mxu0 %v1574
    %v1613 = vpop.f32.mrf.mxu0
    %v1614 = vadd.f32 %v240, %v1613
    %v1615 = vpop.f32.mrf.mxu0
    %v1616 = vpop.f32.mrf.mxu0
    %v1617 = vadd.f32 %v241, %v1616
    %v1618 = vpop.f32.mrf.mxu0
    %1619 = vdwg.mxu0
    %v1620 = vsel %vm509, %v1614, -inf
    %1621 = vmax.xlane.f32.xlu0 %v1620
    %v1622 = vpop.xlane.xlu0 %1621
    %v1623 = vsel %vm509, %v1617, -inf
    %1624 = vmax.xlane.f32.xlu0 %v1623
    %v1625 = vpop.xlane.xlu0 %1624
    %v1626 = vsub.f32 %v1614, %v1622
    %v1627 = vsub.f32 %v1617, %v1625
    %v1628 = vmul.f32 %v1626, 1.442695
    %v1629 = vpow.pop %v1628
    %v1630 = vmul.f32 %v1627, 1.442695
    %v1631 = vpow.pop %v1630
    %v1632 = vsel %vm509, %v1629, 0.0
    %1633 = vadd.xlane.f32.xlu0 %v1632
    %v1634 = vpop.xlane.xlu0 %1633
    %v1635 = vsel %vm509, %v1631, 0.0
    %1636 = vadd.xlane.f32.xlu0 %v1635
    %v1637 = vpop.xlane.xlu0 %1636
    %v1638 = vrcp.pop %v1634
    %v1639 = vrcp.pop %v1637
    %v1640 = vmul.f32 %v1629, %v1638
    %v1641 = vmul.f32 %v1631, %v1639
    %v1642 = vpack.c.bf16 %v1641, %v1640
    %v1644 = vsel %vm509, %v1642, 0
    %1646 = vmatprep.subr.bf16.mxu0 0
    %1647 = vmatpush1.bf16.msra.mxu0 0
    %1648 = vmatprep.subr.bf16.mxu0 0
    %1649 = vmatpush1.bf16.msra.mxu0 0
    %1650 = vmatprep.subr.bf16.mxu0 0
    %1651 = vmatpush1.bf16.msra.mxu0 0
    %1652 = vmatprep.subr.bf16.mxu0 0
    %1653 = vmatpush1.bf16.msra.mxu0 0
    %1654 = vmatprep.subr.bf16.mxu0 0
    %1655 = vmatpush1.bf16.msra.mxu0 0
    %1656 = vmatprep.subr.bf16.mxu0 0
    %1657 = vmatpush1.bf16.msra.mxu0 0
    %1658 = vmatprep.subr.bf16.mxu0 0
    %1659 = vmatpush1.bf16.msra.mxu0 0
    %1660 = vmatprep.subr.bf16.mxu0 0
    %1661 = vmatpush1.bf16.msra.mxu0 %v1572
    %1662 = vmatprep.subr.bf16.mxu0 0
    %1663 = vmatpush2.bf16.msra.mxu0 0
    %1664 = vmatprep.subr.bf16.mxu0 0
    %1665 = vmatpush2.bf16.msra.mxu0 0
    %1666 = vmatprep.subr.bf16.mxu0 0
    %1667 = vmatpush2.bf16.msra.mxu0 0
    %1668 = vmatprep.subr.bf16.mxu0 0
    %1669 = vmatpush2.bf16.msra.mxu0 0
    %1670 = vmatprep.subr.bf16.mxu0 0
    %1671 = vmatpush2.bf16.msra.mxu0 0
    %1672 = vmatprep.subr.bf16.mxu0 0
    %1673 = vmatpush2.bf16.msra.mxu0 0
    %1674 = vmatprep.subr.bf16.mxu0 0
    %1675 = vmatpush2.bf16.msra.mxu0 0
    %1676 = vmatprep.subr.bf16.mxu0 0
    %1677 = vmatpush2.bf16.msra.mxu0 0
    %1678 = vmatprep.mubr.bf16.mxu0 0
    %1679 = vmatmul.mubr.bf16.gmra.mxu0 %v1644
    %v1680 = vpop.f32.mrf.mxu0
    %v1681 = vadd.f32 0.0, %v1680
    %v1682 = vpop.f32.mrf.mxu0
    %v1683 = vpop.f32.mrf.mxu0
    %v1684 = vadd.f32 0.0, %v1683
    %v1685 = vpop.f32.mrf.mxu0
    %1686 = vdwg.mxu0
    %1688 = vrot.lane.b32.xlu0 %v1570, 112
    %v1689 = vpop.permute.xlu0 %1688
    %1691 = vrot.lane.b32.xlu0 %v1571, 112
    %v1692 = vpop.permute.xlu0 %1691
    %v1694 = vsel %vm509, %v1689, 0
    %v1697 = vsel %vm509, %v1692, 0
    %1699 = vmatprep.subr.bf16.mxu0 0
    %1700 = vmatpush1.bf16.xpose.msra.mxu0 0
    %1701 = vmatprep.subr.bf16.mxu0 0
    %1702 = vmatpush1.bf16.xpose.msra.mxu0 0
    %1703 = vmatprep.subr.bf16.mxu0 0
    %1704 = vmatpush1.bf16.xpose.msra.mxu0 0
    %1705 = vmatprep.subr.bf16.mxu0 0
    %1706 = vmatpush1.bf16.xpose.msra.mxu0 0
    %1707 = vmatprep.subr.bf16.mxu0 0
    %1708 = vmatpush1.bf16.xpose.msra.mxu0 0
    %1709 = vmatprep.subr.bf16.mxu0 0
    %1710 = vmatpush1.bf16.xpose.msra.mxu0 0
    %1711 = vmatprep.subr.bf16.mxu0 0
    %1712 = vmatpush1.bf16.xpose.msra.mxu0 0
    %1713 = vmatprep.subr.bf16.mxu0 0
    %1714 = vmatpush1.bf16.xpose.msra.mxu0 %v1697
    %1715 = vmatprep.subr.bf16.mxu0 0
    %1716 = vmatpush2.bf16.xpose.msra.mxu0 0
    %1717 = vmatprep.subr.bf16.mxu0 0
    %1718 = vmatpush2.bf16.xpose.msra.mxu0 0
    %1719 = vmatprep.subr.bf16.mxu0 0
    %1720 = vmatpush2.bf16.xpose.msra.mxu0 0
    %1721 = vmatprep.subr.bf16.mxu0 0
    %1722 = vmatpush2.bf16.xpose.msra.mxu0 0
    %1723 = vmatprep.subr.bf16.mxu0 0
    %1724 = vmatpush2.bf16.xpose.msra.mxu0 0
    %1725 = vmatprep.subr.bf16.mxu0 0
    %1726 = vmatpush2.bf16.xpose.msra.mxu0 0
    %1727 = vmatprep.subr.bf16.mxu0 0
    %1728 = vmatpush2.bf16.xpose.msra.mxu0 0
    %1729 = vmatprep.subr.bf16.mxu0 0
    %1730 = vmatpush2.bf16.xpose.msra.mxu0 0
    %1731 = vmatprep.mubr.bf16.mxu0 0
    %1732 = vmatmul.mubr.bf16.gmra.mxu0 %v1694
    %v1733 = vpop.f32.mrf.mxu0
    %v1734 = vadd.f32 %v240, %v1733
    %v1735 = vpop.f32.mrf.mxu0
    %v1736 = vpop.f32.mrf.mxu0
    %v1737 = vadd.f32 %v241, %v1736
    %v1738 = vpop.f32.mrf.mxu0
    %1739 = vdwg.mxu0
    %v1740 = vsel %vm509, %v1734, -inf
    %1741 = vmax.xlane.f32.xlu0 %v1740
    %v1742 = vpop.xlane.xlu0 %1741
    %v1743 = vsel %vm509, %v1737, -inf
    %1744 = vmax.xlane.f32.xlu0 %v1743
    %v1745 = vpop.xlane.xlu0 %1744
    %v1746 = vsub.f32 %v1734, %v1742
    %v1747 = vsub.f32 %v1737, %v1745
    %v1748 = vmul.f32 %v1746, 1.442695
    %v1749 = vpow.pop %v1748
    %v1750 = vmul.f32 %v1747, 1.442695
    %v1751 = vpow.pop %v1750
    %v1752 = vsel %vm509, %v1749, 0.0
    %1753 = vadd.xlane.f32.xlu0 %v1752
    %v1754 = vpop.xlane.xlu0 %1753
    %v1755 = vsel %vm509, %v1751, 0.0
    %1756 = vadd.xlane.f32.xlu0 %v1755
    %v1757 = vpop.xlane.xlu0 %1756
    %v1758 = vrcp.pop %v1754
    %v1759 = vrcp.pop %v1757
    %v1760 = vmul.f32 %v1749, %v1758
    %v1761 = vmul.f32 %v1751, %v1759
    %v1762 = vpack.c.bf16 %v1761, %v1760
    %1764 = vrot.lane.b32.xlu0 %v1572, 112
    %v1765 = vpop.permute.xlu0 %1764
    %v1768 = vsel %vm509, %v1762, 0
    %1770 = vmatprep.subr.bf16.mxu0 0
    %1771 = vmatpush1.bf16.msra.mxu0 0
    %1772 = vmatprep.subr.bf16.mxu0 0
    %1773 = vmatpush1.bf16.msra.mxu0 0
    %1774 = vmatprep.subr.bf16.mxu0 0
    %1775 = vmatpush1.bf16.msra.mxu0 0
    %1776 = vmatprep.subr.bf16.mxu0 0
    %1777 = vmatpush1.bf16.msra.mxu0 0
    %1778 = vmatprep.subr.bf16.mxu0 0
    %1779 = vmatpush1.bf16.msra.mxu0 0
    %1780 = vmatprep.subr.bf16.mxu0 0
    %1781 = vmatpush1.bf16.msra.mxu0 0
    %1782 = vmatprep.subr.bf16.mxu0 0
    %1783 = vmatpush1.bf16.msra.mxu0 0
    %1784 = vmatprep.subr.bf16.mxu0 0
    %1785 = vmatpush1.bf16.msra.mxu0 %v1765
    %1786 = vmatprep.subr.bf16.mxu0 0
    %1787 = vmatpush2.bf16.msra.mxu0 0
    %1788 = vmatprep.subr.bf16.mxu0 0
    %1789 = vmatpush2.bf16.msra.mxu0 0
    %1790 = vmatprep.subr.bf16.mxu0 0
    %1791 = vmatpush2.bf16.msra.mxu0 0
    %1792 = vmatprep.subr.bf16.mxu0 0
    %1793 = vmatpush2.bf16.msra.mxu0 0
    %1794 = vmatprep.subr.bf16.mxu0 0
    %1795 = vmatpush2.bf16.msra.mxu0 0
    %1796 = vmatprep.subr.bf16.mxu0 0
    %1797 = vmatpush2.bf16.msra.mxu0 0
    %1798 = vmatprep.subr.bf16.mxu0 0
    %1799 = vmatpush2.bf16.msra.mxu0 0
    %1800 = vmatprep.subr.bf16.mxu0 0
    %1801 = vmatpush2.bf16.msra.mxu0 0
    %1802 = vmatprep.mubr.bf16.mxu0 0
    %1803 = vmatmul.mubr.bf16.gmra.mxu0 %v1768
    %v1804 = vpop.f32.mrf.mxu0
    %v1805 = vadd.f32 0.0, %v1804
    %v1806 = vpop.f32.mrf.mxu0
    %v1807 = vpop.f32.mrf.mxu0
    %v1808 = vadd.f32 0.0, %v1807
    %v1809 = vpop.f32.mrf.mxu0
    %1810 = vdwg.mxu0
    %1811 = vrot.lane.b32.xlu0 %v1570, 96
    %v1812 = vpop.permute.xlu0 %1811
    %1813 = vrot.lane.b32.xlu0 %v1571, 96
    %v1814 = vpop.permute.xlu0 %1813
    %v1816 = vsel %vm509, %v1812, 0
    %v1819 = vsel %vm509, %v1814, 0
    %1821 = vmatprep.subr.bf16.mxu0 0
    %1822 = vmatpush1.bf16.xpose.msra.mxu0 0
    %1823 = vmatprep.subr.bf16.mxu0 0
    %1824 = vmatpush1.bf16.xpose.msra.mxu0 0
    %1825 = vmatprep.subr.bf16.mxu0 0
    %1826 = vmatpush1.bf16.xpose.msra.mxu0 0
    %1827 = vmatprep.subr.bf16.mxu0 0
    %1828 = vmatpush1.bf16.xpose.msra.mxu0 0
    %1829 = vmatprep.subr.bf16.mxu0 0
    %1830 = vmatpush1.bf16.xpose.msra.mxu0 0
    %1831 = vmatprep.subr.bf16.mxu0 0
    %1832 = vmatpush1.bf16.xpose.msra.mxu0 0
    %1833 = vmatprep.subr.bf16.mxu0 0
    %1834 = vmatpush1.bf16.xpose.msra.mxu0 0
    %1835 = vmatprep.subr.bf16.mxu0 0
    %1836 = vmatpush1.bf16.xpose.msra.mxu0 %v1819
    %1837 = vmatprep.subr.bf16.mxu0 0
    %1838 = vmatpush2.bf16.xpose.msra.mxu0 0
    %1839 = vmatprep.subr.bf16.mxu0 0
    %1840 = vmatpush2.bf16.xpose.msra.mxu0 0
    %1841 = vmatprep.subr.bf16.mxu0 0
    %1842 = vmatpush2.bf16.xpose.msra.mxu0 0
    %1843 = vmatprep.subr.bf16.mxu0 0
    %1844 = vmatpush2.bf16.xpose.msra.mxu0 0
    %1845 = vmatprep.subr.bf16.mxu0 0
    %1846 = vmatpush2.bf16.xpose.msra.mxu0 0
    %1847 = vmatprep.subr.bf16.mxu0 0
    %1848 = vmatpush2.bf16.xpose.msra.mxu0 0
    %1849 = vmatprep.subr.bf16.mxu0 0
    %1850 = vmatpush2.bf16.xpose.msra.mxu0 0
    %1851 = vmatprep.subr.bf16.mxu0 0
    %1852 = vmatpush2.bf16.xpose.msra.mxu0 0
    %1853 = vmatprep.mubr.bf16.mxu0 0
    %1854 = vmatmul.mubr.bf16.gmra.mxu0 %v1816
    %v1855 = vpop.f32.mrf.mxu0
    %v1856 = vadd.f32 %v240, %v1855
    %v1857 = vpop.f32.mrf.mxu0
    %v1858 = vpop.f32.mrf.mxu0
    %v1859 = vadd.f32 %v241, %v1858
    %v1860 = vpop.f32.mrf.mxu0
    %1861 = vdwg.mxu0
    %v1862 = vsel %vm509, %v1856, -inf
    %1863 = vmax.xlane.f32.xlu0 %v1862
    %v1864 = vpop.xlane.xlu0 %1863
    %v1865 = vsel %vm509, %v1859, -inf
    %1866 = vmax.xlane.f32.xlu0 %v1865
    %v1867 = vpop.xlane.xlu0 %1866
    %v1868 = vsub.f32 %v1856, %v1864
    %v1869 = vsub.f32 %v1859, %v1867
    %v1870 = vmul.f32 %v1868, 1.442695
    %v1871 = vpow.pop %v1870
    %v1872 = vmul.f32 %v1869, 1.442695
    %v1873 = vpow.pop %v1872
    %v1874 = vsel %vm509, %v1871, 0.0
    %1875 = vadd.xlane.f32.xlu0 %v1874
    %v1876 = vpop.xlane.xlu0 %1875
    %v1877 = vsel %vm509, %v1873, 0.0
    %1878 = vadd.xlane.f32.xlu0 %v1877
    %v1879 = vpop.xlane.xlu0 %1878
    %v1880 = vrcp.pop %v1876
    %v1881 = vrcp.pop %v1879
    %v1882 = vmul.f32 %v1871, %v1880
    %v1883 = vmul.f32 %v1873, %v1881
    %v1884 = vpack.c.bf16 %v1883, %v1882
    %1885 = vrot.lane.b32.xlu0 %v1572, 96
    %v1886 = vpop.permute.xlu0 %1885
    %v1889 = vsel %vm509, %v1884, 0
    %1891 = vmatprep.subr.bf16.mxu0 0
    %1892 = vmatpush1.bf16.msra.mxu0 0
    %1893 = vmatprep.subr.bf16.mxu0 0
    %1894 = vmatpush1.bf16.msra.mxu0 0
    %1895 = vmatprep.subr.bf16.mxu0 0
    %1896 = vmatpush1.bf16.msra.mxu0 0
    %1897 = vmatprep.subr.bf16.mxu0 0
    %1898 = vmatpush1.bf16.msra.mxu0 0
    %1899 = vmatprep.subr.bf16.mxu0 0
    %1900 = vmatpush1.bf16.msra.mxu0 0
    %1901 = vmatprep.subr.bf16.mxu0 0
    %1902 = vmatpush1.bf16.msra.mxu0 0
    %1903 = vmatprep.subr.bf16.mxu0 0
    %1904 = vmatpush1.bf16.msra.mxu0 0
    %1905 = vmatprep.subr.bf16.mxu0 0
    %1906 = vmatpush1.bf16.msra.mxu0 %v1886
    %1907 = vmatprep.subr.bf16.mxu0 0
    %1908 = vmatpush2.bf16.msra.mxu0 0
    %1909 = vmatprep.subr.bf16.mxu0 0
    %1910 = vmatpush2.bf16.msra.mxu0 0
    %1911 = vmatprep.subr.bf16.mxu0 0
    %1912 = vmatpush2.bf16.msra.mxu0 0
    %1913 = vmatprep.subr.bf16.mxu0 0
    %1914 = vmatpush2.bf16.msra.mxu0 0
    %1915 = vmatprep.subr.bf16.mxu0 0
    %1916 = vmatpush2.bf16.msra.mxu0 0
    %1917 = vmatprep.subr.bf16.mxu0 0
    %1918 = vmatpush2.bf16.msra.mxu0 0
    %1919 = vmatprep.subr.bf16.mxu0 0
    %1920 = vmatpush2.bf16.msra.mxu0 0
    %1921 = vmatprep.subr.bf16.mxu0 0
    %1922 = vmatpush2.bf16.msra.mxu0 0
    %1923 = vmatprep.mubr.bf16.mxu0 0
    %1924 = vmatmul.mubr.bf16.gmra.mxu0 %v1889
    %v1925 = vpop.f32.mrf.mxu0
    %v1926 = vadd.f32 0.0, %v1925
    %v1927 = vpop.f32.mrf.mxu0
    %v1928 = vpop.f32.mrf.mxu0
    %v1929 = vadd.f32 0.0, %v1928
    %v1930 = vpop.f32.mrf.mxu0
    %1931 = vdwg.mxu0
    %1932 = vrot.lane.b32.xlu0 %v1570, 80
    %v1933 = vpop.permute.xlu0 %1932
    %1934 = vrot.lane.b32.xlu0 %v1571, 80
    %v1935 = vpop.permute.xlu0 %1934
    %v1937 = vsel %vm509, %v1933, 0
    %v1940 = vsel %vm509, %v1935, 0
    %1942 = vmatprep.subr.bf16.mxu0 0
    %1943 = vmatpush1.bf16.xpose.msra.mxu0 0
    %1944 = vmatprep.subr.bf16.mxu0 0
    %1945 = vmatpush1.bf16.xpose.msra.mxu0 0
    %1946 = vmatprep.subr.bf16.mxu0 0
    %1947 = vmatpush1.bf16.xpose.msra.mxu0 0
    %1948 = vmatprep.subr.bf16.mxu0 0
    %1949 = vmatpush1.bf16.xpose.msra.mxu0 0
    %1950 = vmatprep.subr.bf16.mxu0 0
    %1951 = vmatpush1.bf16.xpose.msra.mxu0 0
    %1952 = vmatprep.subr.bf16.mxu0 0
    %1953 = vmatpush1.bf16.xpose.msra.mxu0 0
    %1954 = vmatprep.subr.bf16.mxu0 0
    %1955 = vmatpush1.bf16.xpose.msra.mxu0 0
    %1956 = vmatprep.subr.bf16.mxu0 0
    %1957 = vmatpush1.bf16.xpose.msra.mxu0 %v1940
    %1958 = vmatprep.subr.bf16.mxu0 0
    %1959 = vmatpush2.bf16.xpose.msra.mxu0 0
    %1960 = vmatprep.subr.bf16.mxu0 0
    %1961 = vmatpush2.bf16.xpose.msra.mxu0 0
    %1962 = vmatprep.subr.bf16.mxu0 0
    %1963 = vmatpush2.bf16.xpose.msra.mxu0 0
    %1964 = vmatprep.subr.bf16.mxu0 0
    %1965 = vmatpush2.bf16.xpose.msra.mxu0 0
    %1966 = vmatprep.subr.bf16.mxu0 0
    %1967 = vmatpush2.bf16.xpose.msra.mxu0 0
    %1968 = vmatprep.subr.bf16.mxu0 0
    %1969 = vmatpush2.bf16.xpose.msra.mxu0 0
    %1970 = vmatprep.subr.bf16.mxu0 0
    %1971 = vmatpush2.bf16.xpose.msra.mxu0 0
    %1972 = vmatprep.subr.bf16.mxu0 0
    %1973 = vmatpush2.bf16.xpose.msra.mxu0 0
    %1974 = vmatprep.mubr.bf16.mxu0 0
    %1975 = vmatmul.mubr.bf16.gmra.mxu0 %v1937
    %v1976 = vpop.f32.mrf.mxu0
    %v1977 = vadd.f32 %v240, %v1976
    %v1978 = vpop.f32.mrf.mxu0
    %v1979 = vpop.f32.mrf.mxu0
    %v1980 = vadd.f32 %v241, %v1979
    %v1981 = vpop.f32.mrf.mxu0
    %1982 = vdwg.mxu0
    %v1983 = vsel %vm509, %v1977, -inf
    %1984 = vmax.xlane.f32.xlu0 %v1983
    %v1985 = vpop.xlane.xlu0 %1984
    %v1986 = vsel %vm509, %v1980, -inf
    %1987 = vmax.xlane.f32.xlu0 %v1986
    %v1988 = vpop.xlane.xlu0 %1987
    %v1989 = vsub.f32 %v1977, %v1985
    %v1990 = vsub.f32 %v1980, %v1988
    %v1991 = vmul.f32 %v1989, 1.442695
    %v1992 = vpow.pop %v1991
    %v1993 = vmul.f32 %v1990, 1.442695
    %v1994 = vpow.pop %v1993
    %v1995 = vsel %vm509, %v1992, 0.0
    %1996 = vadd.xlane.f32.xlu0 %v1995
    %v1997 = vpop.xlane.xlu0 %1996
    %v1998 = vsel %vm509, %v1994, 0.0
    %1999 = vadd.xlane.f32.xlu0 %v1998
    %v2000 = vpop.xlane.xlu0 %1999
    %v2001 = vrcp.pop %v1997
    %v2002 = vrcp.pop %v2000
    %v2003 = vmul.f32 %v1992, %v2001
    %v2004 = vmul.f32 %v1994, %v2002
    %v2005 = vpack.c.bf16 %v2004, %v2003
    %2006 = vrot.lane.b32.xlu0 %v1572, 80
    %v2007 = vpop.permute.xlu0 %2006
    %v2010 = vsel %vm509, %v2005, 0
    %2012 = vmatprep.subr.bf16.mxu0 0
    %2013 = vmatpush1.bf16.msra.mxu0 0
    %2014 = vmatprep.subr.bf16.mxu0 0
    %2015 = vmatpush1.bf16.msra.mxu0 0
    %2016 = vmatprep.subr.bf16.mxu0 0
    %2017 = vmatpush1.bf16.msra.mxu0 0
    %2018 = vmatprep.subr.bf16.mxu0 0
    %2019 = vmatpush1.bf16.msra.mxu0 0
    %2020 = vmatprep.subr.bf16.mxu0 0
    %2021 = vmatpush1.bf16.msra.mxu0 0
    %2022 = vmatprep.subr.bf16.mxu0 0
    %2023 = vmatpush1.bf16.msra.mxu0 0
    %2024 = vmatprep.subr.bf16.mxu0 0
    %2025 = vmatpush1.bf16.msra.mxu0 0
    %2026 = vmatprep.subr.bf16.mxu0 0
    %2027 = vmatpush1.bf16.msra.mxu0 %v2007
    %2028 = vmatprep.subr.bf16.mxu0 0
    %2029 = vmatpush2.bf16.msra.mxu0 0
    %2030 = vmatprep.subr.bf16.mxu0 0
    %2031 = vmatpush2.bf16.msra.mxu0 0
    %2032 = vmatprep.subr.bf16.mxu0 0
    %2033 = vmatpush2.bf16.msra.mxu0 0
    %2034 = vmatprep.subr.bf16.mxu0 0
    %2035 = vmatpush2.bf16.msra.mxu0 0
    %2036 = vmatprep.subr.bf16.mxu0 0
    %2037 = vmatpush2.bf16.msra.mxu0 0
    %2038 = vmatprep.subr.bf16.mxu0 0
    %2039 = vmatpush2.bf16.msra.mxu0 0
    %2040 = vmatprep.subr.bf16.mxu0 0
    %2041 = vmatpush2.bf16.msra.mxu0 0
    %2042 = vmatprep.subr.bf16.mxu0 0
    %2043 = vmatpush2.bf16.msra.mxu0 0
    %2044 = vmatprep.mubr.bf16.mxu0 0
    %2045 = vmatmul.mubr.bf16.gmra.mxu0 %v2010
    %v2046 = vpop.f32.mrf.mxu0
    %v2047 = vadd.f32 0.0, %v2046
    %v2048 = vpop.f32.mrf.mxu0
    %v2049 = vpop.f32.mrf.mxu0
    %v2050 = vadd.f32 0.0, %v2049
    %v2051 = vpop.f32.mrf.mxu0
    %2052 = vdwg.mxu0
    %2055 = vrot.lane.b32.xlu0 %v1805, 16
    %v2056 = vpop.permute.xlu0 %2055
    %2057 = vrot.lane.b32.xlu0 %v1808, 16
    %v2058 = vpop.permute.xlu0 %2057
    %2063 = vrot.lane.b32.xlu0 %v1926, 32
    %v2064 = vpop.permute.xlu0 %2063
    %2065 = vrot.lane.b32.xlu0 %v1929, 32
    %v2066 = vpop.permute.xlu0 %2065
    %2071 = vrot.lane.b32.xlu0 %v2047, 48
    %v2072 = vpop.permute.xlu0 %2071
    %2073 = vrot.lane.b32.xlu0 %v2050, 48
    %v2074 = vpop.permute.xlu0 %2073
    %v2077 = vsel %vm509, %v1681, %v2056
    %v2078 = vsel %vm509, %v1684, %v2058
    %v2079 = vsel %vm1016, %v2077, %v2064
    %v2080 = vsel %vm1016, %v2078, %v2066
    %v2081 = vsel %vm1019, %v2079, %v2072
    %v2082 = vsel %vm1019, %v2080, %v2074
    %v2083 = vpack.c.bf16 %v2082, %v2081
    %v2092 = vunpack.c.l.b16 %v1330
    %v2093 = vunpack.c.l.b16 %v1331
    %v2094 = vunpack.c.l.b16 %v1332
    %v2095 = vunpack.c.l.b16 %v1333
    %v2096 = vunpack.c.l.b16 %v1334
    %v2097 = vunpack.c.l.b16 %v1335
    %v2098 = vunpack.c.l.b16 %v1336
    %v2099 = vunpack.c.l.b16 %v1337
    %v2100 = vpack.c.b16 %v2093, %v2092
    %v2101 = vpack.c.b16 %v2095, %v2094
    %v2102 = vpack.c.b16 %v2097, %v2096
    %v2103 = vpack.c.b16 %v2099, %v2098
    %v2109 = vsel %vm294, %v2083, 0
    %2111 = vmatprep.subr.bf16.mxu0 0
    %2112 = vmatpush1.bf16.msra.mxu0 0
    %2113 = vmatprep.subr.bf16.mxu0 0
    %2114 = vmatpush1.bf16.msra.mxu0 0
    %2115 = vmatprep.subr.bf16.mxu0 0
    %2116 = vmatpush1.bf16.msra.mxu0 0
    %2117 = vmatprep.subr.bf16.mxu0 0
    %2118 = vmatpush1.bf16.msra.mxu0 0
    %2119 = vmatprep.subr.bf16.mxu0 0
    %2120 = vmatpush1.bf16.msra.mxu0 %v2103
    %2121 = vmatprep.subr.bf16.mxu0 0
    %2122 = vmatpush1.bf16.msra.mxu0 %v2102
    %2123 = vmatprep.subr.bf16.mxu0 0
    %2124 = vmatpush1.bf16.msra.mxu0 %v2101
    %2125 = vmatprep.subr.bf16.mxu0 0
    %2126 = vmatpush1.bf16.msra.mxu0 %v2100
    %2127 = vmatprep.subr.bf16.mxu0 0
    %2128 = vmatpush2.bf16.msra.mxu0 0
    %2129 = vmatprep.subr.bf16.mxu0 0
    %2130 = vmatpush2.bf16.msra.mxu0 0
    %2131 = vmatprep.subr.bf16.mxu0 0
    %2132 = vmatpush2.bf16.msra.mxu0 0
    %2133 = vmatprep.subr.bf16.mxu0 0
    %2134 = vmatpush2.bf16.msra.mxu0 0
    %2135 = vmatprep.subr.bf16.mxu0 0
    %2136 = vmatpush2.bf16.msra.mxu0 0
    %2137 = vmatprep.subr.bf16.mxu0 0
    %2138 = vmatpush2.bf16.msra.mxu0 0
    %2139 = vmatprep.subr.bf16.mxu0 0
    %2140 = vmatpush2.bf16.msra.mxu0 0
    %2141 = vmatprep.subr.bf16.mxu0 0
    %2142 = vmatpush2.bf16.msra.mxu0 0
    %2143 = vmatprep.mubr.bf16.mxu0 0
    %2144 = vmatmul.mubr.bf16.gmra.mxu0 %v2109
    %v2145 = vpop.f32.mrf.mxu0
    %v2146 = vadd.f32 0.0, %v2145
    %v2147 = vpop.f32.mrf.mxu0
    %v2148 = vpop.f32.mrf.mxu0
    %v2149 = vadd.f32 0.0, %v2148
    %v2150 = vpop.f32.mrf.mxu0
    %2151 = vdwg.mxu0
    %v2152 = vadd.f32 %v1308, %v2146
    %v2153 = vadd.f32 %v1309, %v2149
    %v2154 = vmul.f32 %v2152, %v2152
    %v2155 = vmul.f32 %v2153, %v2153
    %v2156 = vsel %vm294, %v2154, 0.0
    %2157 = vadd.xlane.f32.xlu0 %v2156
    %v2158 = vpop.xlane.xlu0 %2157
    %v2159 = vsel %vm294, %v2155, 0.0
    %2160 = vadd.xlane.f32.xlu0 %v2159
    %v2161 = vpop.xlane.xlu0 %2160
    %v2162 = vmul.f32 %v2158, %v301
    %v2163 = vmul.f32 %v2161, %v301
    %v2164 = vadd.f32 %v2162, 1e-05
    %v2165 = vadd.f32 %v2163, 1e-05
    %v2166 = vrsqrt.pop %v2164
    %v2167 = vrsqrt.pop %v2165
    %v2168 = vmul.f32 %v2152, %v2166
    %v2169 = vmul.f32 %v2153, %v2167
    %v2171 = vlaneseq
    %v2172 = vshrl.u32 %v2171, 7
    %v2173 = vsub.s32 0, %v2172
    %v2174 = vrot.slane %v1339, %v2173
    %v2176 = vmul.f32 %v2168, %v2174
    %v2177 = vmul.f32 %v2169, %v2174
    %v2178 = vpack.c.bf16 %v2177, %v2176
    %v2187 = vunpack.c.l.b16 %v1341
    %v2188 = vunpack.c.h.b16 %v1341
    %v2189 = vunpack.c.l.b16 %v1342
    %v2190 = vunpack.c.h.b16 %v1342
    %v2191 = vunpack.c.l.b16 %v1343
    %v2192 = vunpack.c.h.b16 %v1343
    %v2193 = vunpack.c.l.b16 %v1344
    %v2194 = vunpack.c.h.b16 %v1344
    %v2195 = vunpack.c.l.b16 %v1345
    %v2196 = vunpack.c.h.b16 %v1345
    %v2197 = vunpack.c.l.b16 %v1346
    %v2198 = vunpack.c.h.b16 %v1346
    %v2199 = vunpack.c.l.b16 %v1347
    %v2200 = vunpack.c.h.b16 %v1347
    %v2201 = vunpack.c.l.b16 %v1348
    %v2202 = vunpack.c.h.b16 %v1348
    %v2203 = vpack.c.b16 %v2189, %v2187
    %v2204 = vpack.c.b16 %v2190, %v2188
    %v2205 = vpack.c.b16 %v2193, %v2191
    %v2206 = vpack.c.b16 %v2194, %v2192
    %v2207 = vpack.c.b16 %v2197, %v2195
    %v2208 = vpack.c.b16 %v2198, %v2196
    %v2209 = vpack.c.b16 %v2201, %v2199
    %v2210 = vpack.c.b16 %v2202, %v2200
    %v2220 = vsel %vm294, %v2178, 0
    %2222 = vmatprep.subr.bf16.mxu0 0
    %2223 = vmatpush1.bf16.msra.mxu0 0
    %2224 = vmatprep.subr.bf16.mxu0 0
    %2225 = vmatpush1.bf16.msra.mxu0 0
    %2226 = vmatprep.subr.bf16.mxu0 0
    %2227 = vmatpush1.bf16.msra.mxu0 0
    %2228 = vmatprep.subr.bf16.mxu0 0
    %2229 = vmatpush1.bf16.msra.mxu0 0
    %2230 = vmatprep.subr.bf16.mxu0 %v2210
    %2231 = vmatpush1.bf16.msra.mxu0 %v2209
    %2232 = vmatprep.subr.bf16.mxu0 %v2208
    %2233 = vmatpush1.bf16.msra.mxu0 %v2207
    %2234 = vmatprep.subr.bf16.mxu0 %v2206
    %2235 = vmatpush1.bf16.msra.mxu0 %v2205
    %2236 = vmatprep.subr.bf16.mxu0 %v2204
    %2237 = vmatpush1.bf16.msra.mxu0 %v2203
    %2238 = vmatprep.subr.bf16.mxu0 0
    %2239 = vmatpush2.bf16.msra.mxu0 0
    %2240 = vmatprep.subr.bf16.mxu0 0
    %2241 = vmatpush2.bf16.msra.mxu0 0
    %2242 = vmatprep.subr.bf16.mxu0 0
    %2243 = vmatpush2.bf16.msra.mxu0 0
    %2244 = vmatprep.subr.bf16.mxu0 0
    %2245 = vmatpush2.bf16.msra.mxu0 0
    %2246 = vmatprep.subr.bf16.mxu0 0
    %2247 = vmatpush2.bf16.msra.mxu0 0
    %2248 = vmatprep.subr.bf16.mxu0 0
    %2249 = vmatpush2.bf16.msra.mxu0 0
    %2250 = vmatprep.subr.bf16.mxu0 0
    %2251 = vmatpush2.bf16.msra.mxu0 0
    %2252 = vmatprep.subr.bf16.mxu0 0
    %2253 = vmatpush2.bf16.msra.mxu0 0
    %2254 = vmatprep.mubr.bf16.mxu0 0
    %2255 = vmatmul.mubr.bf16.gmra.mxu0 %v2220
    %v2256 = vpop.f32.mrf.mxu0
    %v2257 = vadd.f32 0.0, %v2256
    %v2258 = vpop.f32.mrf.mxu0
    %v2259 = vadd.f32 0.0, %v2258
    %v2260 = vpop.f32.mrf.mxu0
    %v2261 = vadd.f32 0.0, %v2260
    %v2262 = vpop.f32.mrf.mxu0
    %v2263 = vadd.f32 0.0, %v2262
    %2264 = vdwg.mxu0
    %v2265 = vsub.f32 0.0, %v2257
    %v2266 = vsub.f32 0.0, %v2261
    %v2267 = vmul.f32 %v2265, 1.442695
    %v2268 = vpow.pop %v2267
    %v2269 = vmul.f32 %v2266, 1.442695
    %v2270 = vpow.pop %v2269
    %v2271 = vadd.f32 %v2268, 1.0
    %v2272 = vadd.f32 %v2270, 1.0
    %v2273 = vrcp.pop %v2271
    %v2274 = vrcp.pop %v2272
    %v2275 = vmul.f32 %v2257, %v2273
    %v2276 = vmul.f32 %v2261, %v2274
    %v2277 = vmul.f32 %v2275, %v2259
    %v2278 = vmul.f32 %v2276, %v2263
    %v2279 = vpack.c.bf16 %v2278, %v2277
    %v2296 = vunpack.c.l.b16 %v1350
    %v2297 = vunpack.c.l.b16 %v1351
    %v2298 = vunpack.c.l.b16 %v1352
    %v2299 = vunpack.c.l.b16 %v1353
    %v2300 = vunpack.c.l.b16 %v1354
    %v2301 = vunpack.c.l.b16 %v1355
    %v2302 = vunpack.c.l.b16 %v1356
    %v2303 = vunpack.c.l.b16 %v1357
    %v2304 = vunpack.c.l.b16 %v1358
    %v2305 = vunpack.c.l.b16 %v1359
    %v2306 = vunpack.c.l.b16 %v1360
    %v2307 = vunpack.c.l.b16 %v1361
    %v2308 = vunpack.c.l.b16 %v1362
    %v2309 = vunpack.c.l.b16 %v1363
    %v2310 = vunpack.c.l.b16 %v1364
    %v2311 = vunpack.c.l.b16 %v1365
    %v2312 = vpack.c.b16 %v2297, %v2296
    %v2313 = vpack.c.b16 %v2299, %v2298
    %v2314 = vpack.c.b16 %v2301, %v2300
    %v2315 = vpack.c.b16 %v2303, %v2302
    %v2316 = vpack.c.b16 %v2305, %v2304
    %v2317 = vpack.c.b16 %v2307, %v2306
    %v2318 = vpack.c.b16 %v2309, %v2308
    %v2319 = vpack.c.b16 %v2311, %v2310
    %2328 = vmatprep.subr.bf16.mxu0 0
    %2329 = vmatpush1.bf16.msra.mxu0 %v2319
    %2330 = vmatprep.subr.bf16.mxu0 0
    %2331 = vmatpush1.bf16.msra.mxu0 %v2318
    %2332 = vmatprep.subr.bf16.mxu0 0
    %2333 = vmatpush1.bf16.msra.mxu0 %v2317
    %2334 = vmatprep.subr.bf16.mxu0 0
    %2335 = vmatpush1.bf16.msra.mxu0 %v2316
    %2336 = vmatprep.subr.bf16.mxu0 0
    %2337 = vmatpush1.bf16.msra.mxu0 %v2315
    %2338 = vmatprep.subr.bf16.mxu0 0
    %2339 = vmatpush1.bf16.msra.mxu0 %v2314
    %2340 = vmatprep.subr.bf16.mxu0 0
    %2341 = vmatpush1.bf16.msra.mxu0 %v2313
    %2342 = vmatprep.subr.bf16.mxu0 0
    %2343 = vmatpush1.bf16.msra.mxu0 %v2312
    %2344 = vmatprep.subr.bf16.mxu0 0
    %2345 = vmatpush2.bf16.msra.mxu0 0
    %2346 = vmatprep.subr.bf16.mxu0 0
    %2347 = vmatpush2.bf16.msra.mxu0 0
    %2348 = vmatprep.subr.bf16.mxu0 0
    %2349 = vmatpush2.bf16.msra.mxu0 0
    %2350 = vmatprep.subr.bf16.mxu0 0
    %2351 = vmatpush2.bf16.msra.mxu0 0
    %2352 = vmatprep.subr.bf16.mxu0 0
    %2353 = vmatpush2.bf16.msra.mxu0 0
    %2354 = vmatprep.subr.bf16.mxu0 0
    %2355 = vmatpush2.bf16.msra.mxu0 0
    %2356 = vmatprep.subr.bf16.mxu0 0
    %2357 = vmatpush2.bf16.msra.mxu0 0
    %2358 = vmatprep.subr.bf16.mxu0 0
    %2359 = vmatpush2.bf16.msra.mxu0 0
    %2360 = vmatprep.mubr.bf16.mxu0 0
    %2361 = vmatmul.mubr.bf16.gmra.mxu0 %v2279
    %v2362 = vpop.f32.mrf.mxu0
    %v2363 = vadd.f32 0.0, %v2362
    %v2364 = vpop.f32.mrf.mxu0
    %v2365 = vpop.f32.mrf.mxu0
    %v2366 = vadd.f32 0.0, %v2365
    %v2367 = vpop.f32.mrf.mxu0
    %2368 = vdwg.mxu0
    %v2369 = vadd.f32 %v2152, %v2363
    %v2370 = vadd.f32 %v2153, %v2366
    %v2371 = vld [vmem:[%s8] sm:$0x1]
    %v2372 = vmul.f32 %v2369, %v2369
    %v2373 = vmul.f32 %v2370, %v2370
    %v2374 = vsel %vm294, %v2372, 0.0
    %2375 = vadd.xlane.f32.xlu0 %v2374
    %v2376 = vpop.xlane.xlu0 %2375
    %v2377 = vsel %vm294, %v2373, 0.0
    %2378 = vadd.xlane.f32.xlu0 %v2377
    %v2379 = vpop.xlane.xlu0 %2378
    %v2380 = vmul.f32 %v2376, %v301
    %v2381 = vmul.f32 %v2379, %v301
    %v2382 = vadd.f32 %v2380, 1e-05
    %v2383 = vadd.f32 %v2381, 1e-05
    %v2384 = vrsqrt.pop %v2382
    %v2385 = vrsqrt.pop %v2383
    %v2386 = vmul.f32 %v2369, %v2384
    %v2387 = vmul.f32 %v2370, %v2385
    %v2389 = vlaneseq
    %v2390 = vshrl.u32 %v2389, 7
    %v2391 = vsub.s32 0, %v2390
    %v2392 = vrot.slane %v2371, %v2391
    %v2394 = vmul.f32 %v2386, %v2392
    %v2395 = vmul.f32 %v2387, %v2392
    %v2396 = vpack.c.bf16 %v2395, %v2394
    %v2397 = vld [vmem:[#allocation5] sm:$0xf]
    %v2398 = vld [vmem:[#allocation5 + $0x4] sm:$0xf]
    %v2399 = vld [vmem:[#allocation5 + $0x8] sm:$0xf]
    %v2400 = vld [vmem:[#allocation5 + $0xc] sm:$0xf]
    %v2401 = vld [vmem:[#allocation5 + $0x10] sm:$0xf]
    %v2402 = vld [vmem:[#allocation5 + $0x14] sm:$0xf]
    %v2403 = vld [vmem:[#allocation5 + $0x18] sm:$0xf]
    %v2404 = vld [vmem:[#allocation5 + $0x1c] sm:$0xf]
    %v2413 = vunpack.c.l.b16 %v2397
    %v2414 = vunpack.c.l.b16 %v2398
    %v2415 = vunpack.c.l.b16 %v2399
    %v2416 = vunpack.c.l.b16 %v2400
    %v2417 = vunpack.c.l.b16 %v2401
    %v2418 = vunpack.c.l.b16 %v2402
    %v2419 = vunpack.c.l.b16 %v2403
    %v2420 = vunpack.c.l.b16 %v2404
    %v2421 = vpack.c.b16 %v2414, %v2413
    %v2422 = vpack.c.b16 %v2416, %v2415
    %v2423 = vpack.c.b16 %v2418, %v2417
    %v2424 = vpack.c.b16 %v2420, %v2419
    %v2430 = vsel %vm294, %v2396, 0
    %2432 = vmatprep.subr.bf16.mxu0 0
    %2433 = vmatpush1.bf16.msra.mxu0 0
    %2434 = vmatprep.subr.bf16.mxu0 0
    %2435 = vmatpush1.bf16.msra.mxu0 0
    %2436 = vmatprep.subr.bf16.mxu0 0
    %2437 = vmatpush1.bf16.msra.mxu0 0
    %2438 = vmatprep.subr.bf16.mxu0 0
    %2439 = vmatpush1.bf16.msra.mxu0 0
    %2440 = vmatprep.subr.bf16.mxu0 0
    %2441 = vmatpush1.bf16.msra.mxu0 %v2424
    %2442 = vmatprep.subr.bf16.mxu0 0
    %2443 = vmatpush1.bf16.msra.mxu0 %v2423
    %2444 = vmatprep.subr.bf16.mxu0 0
    %2445 = vmatpush1.bf16.msra.mxu0 %v2422
    %2446 = vmatprep.subr.bf16.mxu0 0
    %2447 = vmatpush1.bf16.msra.mxu0 %v2421
    %2448 = vmatprep.subr.bf16.mxu0 0
    %2449 = vmatpush2.bf16.msra.mxu0 0
    %2450 = vmatprep.subr.bf16.mxu0 0
    %2451 = vmatpush2.bf16.msra.mxu0 0
    %2452 = vmatprep.subr.bf16.mxu0 0
    %2453 = vmatpush2.bf16.msra.mxu0 0
    %2454 = vmatprep.subr.bf16.mxu0 0
    %2455 = vmatpush2.bf16.msra.mxu0 0
    %2456 = vmatprep.subr.bf16.mxu0 0
    %2457 = vmatpush2.bf16.msra.mxu0 0
    %2458 = vmatprep.subr.bf16.mxu0 0
    %2459 = vmatpush2.bf16.msra.mxu0 0
    %2460 = vmatprep.subr.bf16.mxu0 0
    %2461 = vmatpush2.bf16.msra.mxu0 0
    %2462 = vmatprep.subr.bf16.mxu0 0
    %2463 = vmatpush2.bf16.msra.mxu0 0
    %2464 = vmatprep.mubr.bf16.mxu0 0
    %2465 = vmatmul.mubr.bf16.gmra.mxu0 %v2430
    %v2466 = vpop.f32.mrf.mxu0
    %v2467 = vadd.f32 0.0, %v2466
    %v2468 = vpop.f32.mrf.mxu0
    %v2469 = vpop.f32.mrf.mxu0
    %v2470 = vadd.f32 0.0, %v2469
    %v2471 = vpop.f32.mrf.mxu0
    %2472 = vdwg.mxu0
    %2473 = vst [vmem:[#allocation11] sm:$0xff] %v2467
    %2474 = vst [vmem:[#allocation11 + $0x8] sm:$0xff] %v2470
    // Predicated region
    $region74: #{forward.1} parent=1 // pred_check
      _
    $region75: #{forward.1} parent=1 // pred_check_branch
      %2476 = sbr.rel (0) target = $region77
    $region76: #{forward.1} parent=1 // pred_region
      %s2478 = ssub.s32 256, 256
      %2479 = vsyncadd [#allocation4], %s2478
      %s2480 = sshll.u32 [#allocation11], 4
      %s2481 = int_to_ptr.vmem [resolvable:$true] %s2480
      %2486 = dma.vmem_to_hbm [thread:$0]  %s2481, 256, %s13, [#allocation4], 128, 128, 8
    $region77: #{forward.1} parent=1 // pred_fallthru
      _
    // Predicated region
    $region78: #{forward.1} parent=1 // pred_check
      _
    $region79: #{forward.1} parent=1 // pred_check_branch
      %2488 = sbr.rel (0) target = $region81
    $region80: #{forward.1} parent=1 // pred_region
      %2489 = dma.done [#allocation4], 256
    $region81: #{forward.1} parent=1 // pred_fallthru
      _
    %2490 = vsyncpa [#allocation3], 1
    %2491 = vsyncpa [#allocation6], 1
    %2492 = vsyncpa [#allocation9], 1
    %2493 = vsyncpa [#allocation4], 1

</llo_original>
